<compile_context>
chip_gen: v7x
topology: tpu7x:2x2x1
jax: 0.10.0
libtpu: 0.0.40
codegen_flags: <defaults>
</compile_context>

<pallas_src>
import functools

import jax
import jax.numpy as jnp
from jax.experimental import pallas as pl
from jax.experimental.pallas import tpu as pltpu


# ---------------------------------------------------------------------------
# Phase 1: per-channel covariance sums -> gamma-folded whitening matrix.
# ---------------------------------------------------------------------------
def _stats_kernel(x_ref, g_ref, w_ref, *, eps, n_total):
    """x_ref: (2, B, tt, C) f32 [real, imag] for the current T tile.
    g_ref: (2, 1, C) f32 [gamma_r, gamma_i].
    w_ref: (4, 1, C) f32 output block (same block for every grid step): rows
           hold running sums of (dr*dr, dr*di, di*di) while the grid runs and
           (w00, w01, w10, w11) after the last tile."""
    t = pl.program_id(0)

    @pl.when(t == 0)
    def _init():
        w_ref[...] = jnp.zeros_like(w_ref)

    re = x_ref[0]                                       # (B, tt, C)
    im = x_ref[1]

    # batch_cov_3d centres with the mean over B only (T kept) => tile-local.
    dr = re - jnp.mean(re, axis=0, keepdims=True)
    di = im - jnp.mean(im, axis=0, keepdims=True)

    def _sum_rows(v):                                   # (B, tt, C) -> (1, C)
        return jnp.sum(jnp.sum(v, axis=0), axis=0, keepdims=True)

    # dr/di are formed once; each product is a single sweep over VMEM-resident
    # data. The stats pass is bound by the tile's HBM load, so these reduces
    # do not bind; an MXU ones-row matmul reducer is the next step if they do.
    w_ref[0] += _sum_rows(dr * dr)
    w_ref[1] += _sum_rows(dr * di)
    w_ref[2] += _sum_rows(di * di)

    @pl.when(t == pl.num_programs(0) - 1)
    def _finalize():
        inv_nm1 = 1.0 / float(n_total - 1)
        a = w_ref[0] * inv_nm1 + eps                    # cov_rr + eps  (1, C)
        b = w_ref[1] * inv_nm1                          # cov_ri
        d = w_ref[2] * inv_nm1 + eps                    # cov_ii + eps
        # Closed-form inverse sqrt of the SPD matrix A = [[a, b], [b, d]]:
        #   sqrt(A) = (A + s I)/tr,  s = sqrt(det A), tr = sqrt(trace A + 2 s)
        #   => A^(-1/2) = [[d + s, -b], [-b, a + s]] / (s * tr).
        s = jnp.sqrt(a * d - b * b)
        tr = jnp.sqrt(a + d + 2.0 * s)
        inv_st = 1.0 / (s * tr)
        m00 = (d + s) * inv_st
        m01 = -b * inv_st
        m11 = (a + s) * inv_st
        # Fold the complex affine gamma into the whitening matrix so phase 2's
        # per-element tail is only 4 mul + 6 add.
        g_r = g_ref[0]
        g_i = g_ref[1]
        w_ref[0] = g_r * m00 - g_i * m01                # w00
        w_ref[1] = g_r * m01 - g_i * m11                # w01
        w_ref[2] = g_i * m00 + g_r * m01                # w10
        w_ref[3] = g_i * m01 + g_r * m11                # w11


# ---------------------------------------------------------------------------
# Phase 2: out = W @ (x - feature_mean) + beta, tile by tile ('parallel').
# ---------------------------------------------------------------------------
def _whiten_kernel(x_ref, w_ref, b_ref, o_ref):
    """x_ref/o_ref: (2, B, tt, C) f32; w_ref: (4, 1, C); b_ref: (2, 1, C)."""
    re = x_ref[0]                                       # (B, tt, C)
    im = x_ref[1]
    zr = re - jnp.mean(re, axis=-1, keepdims=True)      # feature-mean centred
    zi = im - jnp.mean(im, axis=-1, keepdims=True)
    o_ref[0] = w_ref[0] * zr + w_ref[1] * zi + b_ref[0]
    o_ref[1] = w_ref[2] * zr + w_ref[3] * zi + b_ref[1]


# ---------------------------------------------------------------------------
# Tiling / VMEM budgeting.
# ---------------------------------------------------------------------------
_VMEM_LIMIT_BYTES = 48 * 1024 * 1024   # fits v7x's 64 MiB physical VMEM
_X_BLOCK_TARGET_BYTES = 4 << 20        # per-step (2, B, tt, C) f32 block


def _choose_t_block(B, T, C, target_bytes=_X_BLOCK_TARGET_BYTES):
    """Largest T tile that divides T, is a multiple of 8 (or the whole axis),
    and keeps one (2, B, tt, C) f32 block under `target_bytes`."""
    bytes_per_row = 2 * B * C * 4
    max_rows = max(8, target_bytes // bytes_per_row)
    if T <= max_rows:
        return T
    best = 0
    for tt in range(8, int(max_rows) // 8 * 8 + 1, 8):
        if T % tt == 0:
            best = tt
    if best == 0:
        # No multiple-of-8 divisor under the budget (awkward prime-ish T).
        # TODO(synk): mask partial tiles instead of falling back to the full axis.
        return T
    return best


# ---------------------------------------------------------------------------
# Public wrapper.
# ---------------------------------------------------------------------------
@functools.partial(jax.jit, static_argnames=("eps", "t_block"))
def complex_layer_norm(x, gamma_r, gamma_i, beta_r, beta_i, *, eps=1e-4,
                       t_block=None):
    """ComplexLayerNorm forward. x: complex64 (B, T, C); params: f32 (C,)."""
    assert jnp.iscomplexobj(x), "ComplexLayerNorm expects a complex input"
    B, T, C = x.shape
    assert B * T > 1, "covariance needs at least two (batch*seq) samples"

    tt = _choose_t_block(B, T, C) if t_block is None else int(t_block)
    assert T % tt == 0 and (tt == T or tt % 8 == 0), "bad T tile"
    nt = T // tt

    # Glue: one fused elementwise pass complex64 -> planar f32 (and one back at
    # the end). A zero-copy bitcast is not available for complex dtypes in JAX;
    # allow_input_fusion below lets XLA fuse this producer into the kernels.
    xs = jnp.stack([jnp.real(x), jnp.imag(x)], axis=0).astype(jnp.float32)
    gam = jnp.stack([gamma_r, gamma_i], axis=0).astype(jnp.float32).reshape(2, 1, C)
    bet = jnp.stack([beta_r, beta_i], axis=0).astype(jnp.float32).reshape(2, 1, C)

    # ---- Phase 1: covariance sums -> gamma-folded whitening matrix ----------
    w = pl.pallas_call(
        functools.partial(_stats_kernel, eps=float(eps), n_total=B * T),
        out_shape=jax.ShapeDtypeStruct((4, 1, C), jnp.float32),
        grid_spec=pltpu.PrefetchScalarGridSpec(
            num_scalar_prefetch=0,
            grid=(nt,),
            in_specs=[
                pl.BlockSpec((2, B, tt, C), lambda t: (0, 0, t, 0)),
                pl.BlockSpec((2, 1, C), lambda t: (0, 0, 0)),
            ],
            out_specs=pl.BlockSpec((4, 1, C), lambda t: (0, 0, 0)),
        ),
        compiler_params=pltpu.CompilerParams(
            dimension_semantics=("arbitrary",),        # grid-wide reduction
            vmem_limit_bytes=_VMEM_LIMIT_BYTES,
            allow_input_fusion=[True, True],
        ),
    )(xs, gam)

    # ---- Phase 2: whiten + affine, tiled & megacore-parallel ----------------
    out = pl.pallas_call(
        _whiten_kernel,
        out_shape=jax.ShapeDtypeStruct((2, B, T, C), jnp.float32),
        grid_spec=pltpu.PrefetchScalarGridSpec(
            num_scalar_prefetch=0,
            grid=(nt,),
            in_specs=[
                pl.BlockSpec((2, B, tt, C), lambda t: (0, 0, t, 0)),
                pl.BlockSpec((4, 1, C), lambda t: (0, 0, 0)),
                pl.BlockSpec((2, 1, C), lambda t: (0, 0, 0)),
            ],
            out_specs=pl.BlockSpec((2, B, tt, C), lambda t: (0, 0, t, 0)),
        ),
        compiler_params=pltpu.CompilerParams(
            dimension_semantics=("parallel",),          # both TCs on v7x
            vmem_limit_bytes=_VMEM_LIMIT_BYTES,
            allow_input_fusion=[True, False, True],
        ),
    )(xs, w, bet)

    return jax.lax.complex(out[0], out[1])              # complex64 (B, T, C)


# ---------------------------------------------------------------------------
# Pure-JAX reference (transcribes the PyTorch forward, eigh-based inverse
# sqrt); used only for validation. PyTorch runs the eig in float64; f32 is
# ample for the tolerance used below.
# ---------------------------------------------------------------------------
def _complex_layer_norm_ref(x, gamma_r, gamma_i, beta_r, beta_i, eps):
    re = jnp.real(x).astype(jnp.float32)
    im = jnp.imag(x).astype(jnp.float32)
    B, T, C = re.shape

    mean_r = jnp.mean(re, axis=-1, keepdims=True)
    mean_i = jnp.mean(im, axis=-1, keepdims=True)

    # batch_cov_3d(stack((real, imag), -1)): mean over B (keep T), sum of outer
    # products over B*T, / (B*T - 1).
    pts = jnp.transpose(jnp.stack([re, im], axis=-1), (2, 0, 1, 3))   # (C,B,T,2)
    n = B * T
    bmean = jnp.mean(pts, axis=1, keepdims=True)                      # (C,1,T,2)
    diffs = (pts - bmean).reshape(C, n, 2)
    cov = jnp.einsum("cnd,cne->cde", diffs, diffs) / (n - 1)          # (C,2,2)

    a_mat = cov + eps * jnp.eye(2, dtype=jnp.float32)
    evals, q = jnp.linalg.eigh(jnp.linalg.inv(a_mat))
    inv_sqrt = jnp.einsum("cik,ck,cjk->cij", q, jnp.sqrt(evals), q)   # (C,2,2)

    zv = jnp.stack([re - mean_r, im - mean_i], axis=-1)               # (B,T,C,2)
    hat = jnp.einsum("cij,btcj->btci", inv_sqrt, zv)
    hat_r, hat_i = hat[..., 0], hat[..., 1]

    out_r = gamma_r * hat_r - gamma_i * hat_i + beta_r
    out_i = gamma_r * hat_i + gamma_i * hat_r + beta_i
    return jax.lax.complex(out_r, out_i)


if __name__ == "__main__":
    def _run_case(key, B, T, C, t_block=None):
        kr, ki, kgr, kgi, kbr, kbi = jax.random.split(key, 6)
        x = jax.lax.complex(
            jax.random.normal(kr, (B, T, C), dtype=jnp.float32),
            jax.random.normal(ki, (B, T, C), dtype=jnp.float32),
        )                                                             # complex64
        # Module params (defaults gamma=1+0i, beta=0); perturbed so the folded
        # complex affine path is actually exercised.
        gamma_r = 1.0 + 0.1 * jax.random.normal(kgr, (C,), dtype=jnp.float32)
        gamma_i = 0.1 * jax.random.normal(kgi, (C,), dtype=jnp.float32)
        beta_r = 0.1 * jax.random.normal(kbr, (C,), dtype=jnp.float32)
        beta_i = 0.1 * jax.random.normal(kbi, (C,), dtype=jnp.float32)
        eps = 1e-4

        y = complex_layer_norm(x, gamma_r, gamma_i, beta_r, beta_i,
                               eps=eps, t_block=t_block)
        jax.block_until_ready(y)

        y_ref = _complex_layer_norm_ref(x, gamma_r, gamma_i, beta_r, beta_i, eps)
        assert y.shape == (B, T, C) and y.dtype == jnp.complex64
        err = float(jnp.max(jnp.abs(y - y_ref)))
        assert err < 5e-4, f"mismatch vs reference at ({B},{T},{C}): {err}"

    key = jax.random.PRNGKey(0)
    k1, k2 = jax.random.split(key)
    # Case 1: multi-tile grid path (4 T-tiles of 16 rows), lane-dense C=128.
    _run_case(k1, B=2, T=64, C=128, t_block=16)
    # Case 2: single-tile path with a non-128-multiple feature dim.
    _run_case(k2, B=3, T=8, C=96)

    print("KERNEL_OK")
</pallas_src>

<mosaic_0001>
module attributes {stable_mosaic.version = 11 : i64} {
  func.func @_stats_kernel(%arg0: i32, %arg1: memref<2x2x16x128xf32, #tpu.memory_space<vmem>>, %arg2: memref<2x1x128xf32, #tpu.memory_space<vmem>>, %arg3: memref<4x1x128xf32, #tpu.memory_space<vmem>>) attributes {dimension_semantics = [#tpu.dimension_semantics<arbitrary>], iteration_bounds = array<i64: 4>, scalar_prefetch = 0 : i64, scratch_operands = 0 : i64, tpu.core_type = #tpu.core_type<tc>, window_params = [{transform_indices = @transform_0, window_bounds = array<i64: 2, 2, 16, 128>}, {pipeline_mode = #tpu.pipeline_mode<synchronous>, transform_indices = @transform_1, window_bounds = array<i64: 2, 1, 128>}, {pipeline_mode = #tpu.pipeline_mode<synchronous>, transform_indices = @transform_2, window_bounds = array<i64: 4, 1, 128>}]} {
    %c0_i32 = arith.constant 0 : i32
    %0 = arith.cmpi eq, %arg0, %c0_i32 : i32
    %1 = arith.extui %0 : i1 to i32
    %c0_i32_0 = arith.constant 0 : i32
    %2 = arith.cmpi ne, %1, %c0_i32_0 : i32
    scf.if %2 {
      %cst_34 = arith.constant 0.000000e+00 : f32
      %52 = vector.broadcast %cst_34 : f32 to vector<4x1x128xf32>
      %c0_35 = arith.constant 0 : index
      %c0_36 = arith.constant 0 : index
      %c0_37 = arith.constant 0 : index
      %53 = vector.load %arg3[%c0_35, %c0_36, %c0_37] : memref<4x1x128xf32, #tpu.memory_space<vmem>>, vector<4x1x128xf32>
      tpu.vector_store %arg3[%c0_35, %c0_36, %c0_37], %52 {strides = array<i32>} : memref<4x1x128xf32, #tpu.memory_space<vmem>>, vector<4x1x128xf32>,
    } else {
    }
    %c0 = arith.constant 0 : index
    %c0_1 = arith.constant 0 : index
    %c0_2 = arith.constant 0 : index
    %c0_3 = arith.constant 0 : index
    %3 = vector.load %arg1[%c0, %c0_1, %c0_2, %c0_3] : memref<2x2x16x128xf32, #tpu.memory_space<vmem>>, vector<1x2x16x128xf32>
    %4 = vector.shape_cast %3 : vector<1x2x16x128xf32> to vector<2x16x128xf32>
    %c1 = arith.constant 1 : index
    %c0_4 = arith.constant 0 : index
    %c0_5 = arith.constant 0 : index
    %c0_6 = arith.constant 0 : index
    %5 = vector.load %arg1[%c1, %c0_4, %c0_5, %c0_6] : memref<2x2x16x128xf32, #tpu.memory_space<vmem>>, vector<1x2x16x128xf32>
    %6 = vector.shape_cast %5 : vector<1x2x16x128xf32> to vector<2x16x128xf32>
    %cst = arith.constant dense<0.000000e+00> : vector<16x128xf32>
    %7 = vector.multi_reduction <add>, %4, %cst [0] : vector<2x16x128xf32> to vector<16x128xf32>
    %8 = vector.shape_cast %7 : vector<16x128xf32> to vector<1x16x128xf32>
    %cst_7 = arith.constant 2.000000e+00 : f32
    %9 = vector.broadcast %cst_7 : f32 to vector<1x16x128xf32>
    %10 = arith.divf %8, %9 : vector<1x16x128xf32>
    %11 = vector.broadcast %10 : vector<1x16x128xf32> to vector<2x16x128xf32>
    %12 = arith.subf %4, %11 : vector<2x16x128xf32>
    %cst_8 = arith.constant dense<0.000000e+00> : vector<16x128xf32>
    %13 = vector.multi_reduction <add>, %6, %cst_8 [0] : vector<2x16x128xf32> to vector<16x128xf32>
    %14 = vector.shape_cast %13 : vector<16x128xf32> to vector<1x16x128xf32>
    %cst_9 = arith.constant 2.000000e+00 : f32
    %15 = vector.broadcast %cst_9 : f32 to vector<1x16x128xf32>
    %16 = arith.divf %14, %15 : vector<1x16x128xf32>
    %17 = vector.broadcast %16 : vector<1x16x128xf32> to vector<2x16x128xf32>
    %18 = arith.subf %6, %17 : vector<2x16x128xf32>
    %c0_10 = arith.constant 0 : index
    %c0_11 = arith.constant 0 : index
    %c0_12 = arith.constant 0 : index
    %19 = vector.load %arg3[%c0_10, %c0_11, %c0_12] : memref<4x1x128xf32, #tpu.memory_space<vmem>>, vector<1x1x128xf32>
    %20 = vector.shape_cast %19 : vector<1x1x128xf32> to vector<1x128xf32>
    %21 = arith.mulf %12, %12 : vector<2x16x128xf32>
    %cst_13 = arith.constant dense<0.000000e+00> : vector<16x128xf32>
    %22 = vector.multi_reduction <add>, %21, %cst_13 [0] : vector<2x16x128xf32> to vector<16x128xf32>
    %cst_14 = arith.constant dense<0.000000e+00> : vector<128xf32>
    %23 = vector.multi_reduction <add>, %22, %cst_14 [0] : vector<16x128xf32> to vector<128xf32>
    %24 = vector.shape_cast %23 : vector<128xf32> to vector<1x128xf32>
    %25 = arith.addf %20, %24 : vector<1x128xf32>
    %c0_15 = arith.constant 0 : index
    %c0_16 = arith.constant 0 : index
    %c0_17 = arith.constant 0 : index
    %26 = vector.load %arg3[%c0_15, %c0_16, %c0_17] : memref<4x1x128xf32, #tpu.memory_space<vmem>>, vector<1x1x128xf32>
    %27 = vector.shape_cast %26 : vector<1x1x128xf32> to vector<1x128xf32>
    %28 = vector.shape_cast %25 : vector<1x128xf32> to vector<1x1x128xf32>
    tpu.vector_store %arg3[%c0_15, %c0_16, %c0_17], %28 {strides = array<i32>} : memref<4x1x128xf32, #tpu.memory_space<vmem>>, vector<1x1x128xf32>,
    %c1_18 = arith.constant 1 : index
    %c0_19 = arith.constant 0 : index
    %c0_20 = arith.constant 0 : index
    %29 = vector.load %arg3[%c1_18, %c0_19, %c0_20] : memref<4x1x128xf32, #tpu.memory_space<vmem>>, vector<1x1x128xf32>
    %30 = vector.shape_cast %29 : vector<1x1x128xf32> to vector<1x128xf32>
    %31 = arith.mulf %12, %18 : vector<2x16x128xf32>
    %cst_21 = arith.constant dense<0.000000e+00> : vector<16x128xf32>
    %32 = vector.multi_reduction <add>, %31, %cst_21 [0] : vector<2x16x128xf32> to vector<16x128xf32>
    %cst_22 = arith.constant dense<0.000000e+00> : vector<128xf32>
    %33 = vector.multi_reduction <add>, %32, %cst_22 [0] : vector<16x128xf32> to vector<128xf32>
    %34 = vector.shape_cast %33 : vector<128xf32> to vector<1x128xf32>
    %35 = arith.addf %30, %34 : vector<1x128xf32>
    %c1_23 = arith.constant 1 : index
    %c0_24 = arith.constant 0 : index
    %c0_25 = arith.constant 0 : index
    %36 = vector.load %arg3[%c1_23, %c0_24, %c0_25] : memref<4x1x128xf32, #tpu.memory_space<vmem>>, vector<1x1x128xf32>
    %37 = vector.shape_cast %36 : vector<1x1x128xf32> to vector<1x128xf32>
    %38 = vector.shape_cast %35 : vector<1x128xf32> to vector<1x1x128xf32>
    tpu.vector_store %arg3[%c1_23, %c0_24, %c0_25], %38 {strides = array<i32>} : memref<4x1x128xf32, #tpu.memory_space<vmem>>, vector<1x1x128xf32>,
    %c2 = arith.constant 2 : index
    %c0_26 = arith.constant 0 : index
    %c0_27 = arith.constant 0 : index
    %39 = vector.load %arg3[%c2, %c0_26, %c0_27] : memref<4x1x128xf32, #tpu.memory_space<vmem>>, vector<1x1x128xf32>
    %40 = vector.shape_cast %39 : vector<1x1x128xf32> to vector<1x128xf32>
    %41 = arith.mulf %18, %18 : vector<2x16x128xf32>
    %cst_28 = arith.constant dense<0.000000e+00> : vector<16x128xf32>
    %42 = vector.multi_reduction <add>, %41, %cst_28 [0] : vector<2x16x128xf32> to vector<16x128xf32>
    %cst_29 = arith.constant dense<0.000000e+00> : vector<128xf32>
    %43 = vector.multi_reduction <add>, %42, %cst_29 [0] : vector<16x128xf32> to vector<128xf32>
    %44 = vector.shape_cast %43 : vector<128xf32> to vector<1x128xf32>
    %45 = arith.addf %40, %44 : vector<1x128xf32>
    %c2_30 = arith.constant 2 : index
    %c0_31 = arith.constant 0 : index
    %c0_32 = arith.constant 0 : index
    %46 = vector.load %arg3[%c2_30, %c0_31, %c0_32] : memref<4x1x128xf32, #tpu.memory_space<vmem>>, vector<1x1x128xf32>
    %47 = vector.shape_cast %46 : vector<1x1x128xf32> to vector<1x128xf32>
    %48 = vector.shape_cast %45 : vector<1x128xf32> to vector<1x1x128xf32>
    tpu.vector_store %arg3[%c2_30, %c0_31, %c0_32], %48 {strides = array<i32>} : memref<4x1x128xf32, #tpu.memory_space<vmem>>, vector<1x1x128xf32>,
    %c3_i32 = arith.constant 3 : i32
    %49 = arith.cmpi eq, %arg0, %c3_i32 : i32
    %50 = arith.extui %49 : i1 to i32
    %c0_i32_33 = arith.constant 0 : i32
    %51 = arith.cmpi ne, %50, %c0_i32_33 : i32
    scf.if %51 {
      %c0_34 = arith.constant 0 : index
      %c0_35 = arith.constant 0 : index
      %c0_36 = arith.constant 0 : index
      %52 = vector.load %arg3[%c0_34, %c0_35, %c0_36] : memref<4x1x128xf32, #tpu.memory_space<vmem>>, vector<1x1x128xf32>
      %53 = vector.shape_cast %52 : vector<1x1x128xf32> to vector<1x128xf32>
      %cst_37 = arith.constant 0.00787401571 : f32
      %54 = vector.broadcast %cst_37 : f32 to vector<1x128xf32>
      %55 = arith.mulf %53, %54 : vector<1x128xf32>
      %cst_38 = arith.constant 9.99999974E-5 : f32
      %56 = vector.broadcast %cst_38 : f32 to vector<1x128xf32>
      %57 = arith.addf %55, %56 : vector<1x128xf32>
      %c1_39 = arith.constant 1 : index
      %c0_40 = arith.constant 0 : index
      %c0_41 = arith.constant 0 : index
      %58 = vector.load %arg3[%c1_39, %c0_40, %c0_41] : memref<4x1x128xf32, #tpu.memory_space<vmem>>, vector<1x1x128xf32>
      %59 = vector.shape_cast %58 : vector<1x1x128xf32> to vector<1x128xf32>
      %cst_42 = arith.constant 0.00787401571 : f32
      %60 = vector.broadcast %cst_42 : f32 to vector<1x128xf32>
      %61 = arith.mulf %59, %60 : vector<1x128xf32>
      %c2_43 = arith.constant 2 : index
      %c0_44 = arith.constant 0 : index
      %c0_45 = arith.constant 0 : index
      %62 = vector.load %arg3[%c2_43, %c0_44, %c0_45] : memref<4x1x128xf32, #tpu.memory_space<vmem>>, vector<1x1x128xf32>
      %63 = vector.shape_cast %62 : vector<1x1x128xf32> to vector<1x128xf32>
      %cst_46 = arith.constant 0.00787401571 : f32
      %64 = vector.broadcast %cst_46 : f32 to vector<1x128xf32>
      %65 = arith.mulf %63, %64 : vector<1x128xf32>
      %cst_47 = arith.constant 9.99999974E-5 : f32
      %66 = vector.broadcast %cst_47 : f32 to vector<1x128xf32>
      %67 = arith.addf %65, %66 : vector<1x128xf32>
      %68 = arith.mulf %57, %67 : vector<1x128xf32>
      %69 = arith.mulf %61, %61 : vector<1x128xf32>
      %70 = arith.subf %68, %69 : vector<1x128xf32>
      %71 = math.sqrt %70 : vector<1x128xf32>
      %72 = arith.addf %57, %67 : vector<1x128xf32>
      %cst_48 = arith.constant 2.000000e+00 : f32
      %73 = vector.broadcast %cst_48 : f32 to vector<1x128xf32>
      %74 = arith.mulf %73, %71 : vector<1x128xf32>
      %75 = arith.addf %72, %74 : vector<1x128xf32>
      %76 = math.sqrt %75 : vector<1x128xf32>
      %77 = arith.mulf %71, %76 : vector<1x128xf32>
      %cst_49 = arith.constant 1.000000e+00 : f32
      %78 = vector.broadcast %cst_49 : f32 to vector<1x128xf32>
      %79 = arith.divf %78, %77 : vector<1x128xf32>
      %80 = arith.addf %67, %71 : vector<1x128xf32>
      %81 = arith.mulf %80, %79 : vector<1x128xf32>
      %cst_50 = arith.constant 0.000000e+00 : f32
      %82 = vector.broadcast %cst_50 : f32 to vector<1x128xf32>
      %83 = arith.subf %82, %61 : vector<1x128xf32>
      %84 = arith.mulf %83, %79 : vector<1x128xf32>
      %85 = arith.addf %57, %71 : vector<1x128xf32>
      %86 = arith.mulf %85, %79 : vector<1x128xf32>
      %c0_51 = arith.constant 0 : index
      %c0_52 = arith.constant 0 : index
      %c0_53 = arith.constant 0 : index
      %87 = vector.load %arg2[%c0_51, %c0_52, %c0_53] : memref<2x1x128xf32, #tpu.memory_space<vmem>>, vector<1x1x128xf32>
      %88 = vector.shape_cast %87 : vector<1x1x128xf32> to vector<1x128xf32>
      %c1_54 = arith.constant 1 : index
      %c0_55 = arith.constant 0 : index
      %c0_56 = arith.constant 0 : index
      %89 = vector.load %arg2[%c1_54, %c0_55, %c0_56] : memref<2x1x128xf32, #tpu.memory_space<vmem>>, vector<1x1x128xf32>
      %90 = vector.shape_cast %89 : vector<1x1x128xf32> to vector<1x128xf32>
      %91 = arith.mulf %88, %81 : vector<1x128xf32>
      %92 = arith.mulf %90, %84 : vector<1x128xf32>
      %93 = arith.subf %91, %92 : vector<1x128xf32>
      %c0_57 = arith.constant 0 : index
      %c0_58 = arith.constant 0 : index
      %c0_59 = arith.constant 0 : index
      %94 = vector.load %arg3[%c0_57, %c0_58, %c0_59] : memref<4x1x128xf32, #tpu.memory_space<vmem>>, vector<1x1x128xf32>
      %95 = vector.shape_cast %94 : vector<1x1x128xf32> to vector<1x128xf32>
      %96 = vector.shape_cast %93 : vector<1x128xf32> to vector<1x1x128xf32>
      tpu.vector_store %arg3[%c0_57, %c0_58, %c0_59], %96 {strides = array<i32>} : memref<4x1x128xf32, #tpu.memory_space<vmem>>, vector<1x1x128xf32>,
      %97 = arith.mulf %88, %84 : vector<1x128xf32>
      %98 = arith.mulf %90, %86 : vector<1x128xf32>
      %99 = arith.subf %97, %98 : vector<1x128xf32>
      %c1_60 = arith.constant 1 : index
      %c0_61 = arith.constant 0 : index
      %c0_62 = arith.constant 0 : index
      %100 = vector.load %arg3[%c1_60, %c0_61, %c0_62] : memref<4x1x128xf32, #tpu.memory_space<vmem>>, vector<1x1x128xf32>
      %101 = vector.shape_cast %100 : vector<1x1x128xf32> to vector<1x128xf32>
      %102 = vector.shape_cast %99 : vector<1x128xf32> to vector<1x1x128xf32>
      tpu.vector_store %arg3[%c1_60, %c0_61, %c0_62], %102 {strides = array<i32>} : memref<4x1x128xf32, #tpu.memory_space<vmem>>, vector<1x1x128xf32>,
      %103 = arith.mulf %90, %81 : vector<1x128xf32>
      %104 = arith.mulf %88, %84 : vector<1x128xf32>
      %105 = arith.addf %103, %104 : vector<1x128xf32>
      %c2_63 = arith.constant 2 : index
      %c0_64 = arith.constant 0 : index
      %c0_65 = arith.constant 0 : index
      %106 = vector.load %arg3[%c2_63, %c0_64, %c0_65] : memref<4x1x128xf32, #tpu.memory_space<vmem>>, vector<1x1x128xf32>
      %107 = vector.shape_cast %106 : vector<1x1x128xf32> to vector<1x128xf32>
      %108 = vector.shape_cast %105 : vector<1x128xf32> to vector<1x1x128xf32>
      tpu.vector_store %arg3[%c2_63, %c0_64, %c0_65], %108 {strides = array<i32>} : memref<4x1x128xf32, #tpu.memory_space<vmem>>, vector<1x1x128xf32>,
      %109 = arith.mulf %90, %84 : vector<1x128xf32>
      %110 = arith.mulf %88, %86 : vector<1x128xf32>
      %111 = arith.addf %109, %110 : vector<1x128xf32>
      %c3 = arith.constant 3 : index
      %c0_66 = arith.constant 0 : index
      %c0_67 = arith.constant 0 : index
      %112 = vector.load %arg3[%c3, %c0_66, %c0_67] : memref<4x1x128xf32, #tpu.memory_space<vmem>>, vector<1x1x128xf32>
      %113 = vector.shape_cast %112 : vector<1x1x128xf32> to vector<1x128xf32>
      %114 = vector.shape_cast %111 : vector<1x128xf32> to vector<1x1x128xf32>
      tpu.vector_store %arg3[%c3, %c0_66, %c0_67], %114 {strides = array<i32>} : memref<4x1x128xf32, #tpu.memory_space<vmem>>, vector<1x1x128xf32>,
    } else {
    }
    return
  }
  func.func @transform_0(%arg0: i32) -> (i32, i32, i32, i32) {
    %c0_i32 = arith.constant 0 : i32
    %c0_i32_0 = arith.constant 0 : i32
    %c0_i32_1 = arith.constant 0 : i32
    %c0_i32_2 = arith.constant 0 : i32
    return %c0_i32, %c0_i32_0, %arg0, %c0_i32_1 : i32, i32, i32, i32
  }
  func.func @transform_1(%arg0: i32) -> (i32, i32, i32) {
    %c0_i32 = arith.constant 0 : i32
    %c0_i32_0 = arith.constant 0 : i32
    %c0_i32_1 = arith.constant 0 : i32
    %c0_i32_2 = arith.constant 0 : i32
    return %c0_i32, %c0_i32_0, %c0_i32_1 : i32, i32, i32
  }
  func.func @transform_2(%arg0: i32) -> (i32, i32, i32) {
    %c0_i32 = arith.constant 0 : i32
    %c0_i32_0 = arith.constant 0 : i32
    %c0_i32_1 = arith.constant 0 : i32
    %c0_i32_2 = arith.constant 0 : i32
    return %c0_i32, %c0_i32_0, %c0_i32_1 : i32, i32, i32
  }
}

module attributes {stable_mosaic.version = 11 : i64} {
  func.func @_whiten_kernel(%arg0: i32, %arg1: memref<2x2x16x128xf32, #tpu.memory_space<vmem>>, %arg2: memref<4x1x128xf32, #tpu.memory_space<vmem>>, %arg3: memref<2x1x128xf32, #tpu.memory_space<vmem>>, %arg4: memref<2x2x16x128xf32, #tpu.memory_space<vmem>>) attributes {dimension_semantics = [#tpu.dimension_semantics<parallel>], iteration_bounds = array<i64: 4>, scalar_prefetch = 0 : i64, scratch_operands = 0 : i64, tpu.core_type = #tpu.core_type<tc>, window_params = [{transform_indices = @transform_0, window_bounds = array<i64: 2, 2, 16, 128>}, {pipeline_mode = #tpu.pipeline_mode<synchronous>, transform_indices = @transform_1, window_bounds = array<i64: 4, 1, 128>}, {pipeline_mode = #tpu.pipeline_mode<synchronous>, transform_indices = @transform_2, window_bounds = array<i64: 2, 1, 128>}, {transform_indices = @transform_3, window_bounds = array<i64: 2, 2, 16, 128>}]} {
    %c0 = arith.constant 0 : index
    %c0_0 = arith.constant 0 : index
    %c0_1 = arith.constant 0 : index
    %c0_2 = arith.constant 0 : index
    %0 = vector.load %arg1[%c0, %c0_0, %c0_1, %c0_2] : memref<2x2x16x128xf32, #tpu.memory_space<vmem>>, vector<1x2x16x128xf32>
    %1 = vector.shape_cast %0 : vector<1x2x16x128xf32> to vector<2x16x128xf32>
    %c1 = arith.constant 1 : index
    %c0_3 = arith.constant 0 : index
    %c0_4 = arith.constant 0 : index
    %c0_5 = arith.constant 0 : index
    %2 = vector.load %arg1[%c1, %c0_3, %c0_4, %c0_5] : memref<2x2x16x128xf32, #tpu.memory_space<vmem>>, vector<1x2x16x128xf32>
    %3 = vector.shape_cast %2 : vector<1x2x16x128xf32> to vector<2x16x128xf32>
    %cst = arith.constant dense<0.000000e+00> : vector<2x16xf32>
    %4 = vector.multi_reduction <add>, %1, %cst [2] : vector<2x16x128xf32> to vector<2x16xf32>
    %5 = vector.shape_cast %4 : vector<2x16xf32> to vector<2x16x1xf32>
    %cst_6 = arith.constant 1.280000e+02 : f32
    %6 = vector.broadcast %cst_6 : f32 to vector<2x16x1xf32>
    %7 = arith.divf %5, %6 : vector<2x16x1xf32>
    %8 = vector.broadcast %7 : vector<2x16x1xf32> to vector<2x16x128xf32>
    %9 = arith.subf %1, %8 : vector<2x16x128xf32>
    %cst_7 = arith.constant dense<0.000000e+00> : vector<2x16xf32>
    %10 = vector.multi_reduction <add>, %3, %cst_7 [2] : vector<2x16x128xf32> to vector<2x16xf32>
    %11 = vector.shape_cast %10 : vector<2x16xf32> to vector<2x16x1xf32>
    %cst_8 = arith.constant 1.280000e+02 : f32
    %12 = vector.broadcast %cst_8 : f32 to vector<2x16x1xf32>
    %13 = arith.divf %11, %12 : vector<2x16x1xf32>
    %14 = vector.broadcast %13 : vector<2x16x1xf32> to vector<2x16x128xf32>
    %15 = arith.subf %3, %14 : vector<2x16x128xf32>
    %c0_9 = arith.constant 0 : index
    %c0_10 = arith.constant 0 : index
    %c0_11 = arith.constant 0 : index
    %16 = vector.load %arg2[%c0_9, %c0_10, %c0_11] : memref<4x1x128xf32, #tpu.memory_space<vmem>>, vector<1x1x128xf32>
    %17 = vector.shape_cast %16 : vector<1x1x128xf32> to vector<1x128xf32>
    %18 = vector.shape_cast %17 : vector<1x128xf32> to vector<1x1x128xf32>
    %19 = vector.broadcast %18 : vector<1x1x128xf32> to vector<2x16x128xf32>
    %20 = arith.mulf %19, %9 : vector<2x16x128xf32>
    %c1_12 = arith.constant 1 : index
    %c0_13 = arith.constant 0 : index
    %c0_14 = arith.constant 0 : index
    %21 = vector.load %arg2[%c1_12, %c0_13, %c0_14] : memref<4x1x128xf32, #tpu.memory_space<vmem>>, vector<1x1x128xf32>
    %22 = vector.shape_cast %21 : vector<1x1x128xf32> to vector<1x128xf32>
    %23 = vector.shape_cast %22 : vector<1x128xf32> to vector<1x1x128xf32>
    %24 = vector.broadcast %23 : vector<1x1x128xf32> to vector<2x16x128xf32>
    %25 = arith.mulf %24, %15 : vector<2x16x128xf32>
    %26 = arith.addf %20, %25 : vector<2x16x128xf32>
    %c0_15 = arith.constant 0 : index
    %c0_16 = arith.constant 0 : index
    %c0_17 = arith.constant 0 : index
    %27 = vector.load %arg3[%c0_15, %c0_16, %c0_17] : memref<2x1x128xf32, #tpu.memory_space<vmem>>, vector<1x1x128xf32>
    %28 = vector.shape_cast %27 : vector<1x1x128xf32> to vector<1x128xf32>
    %29 = vector.shape_cast %28 : vector<1x128xf32> to vector<1x1x128xf32>
    %30 = vector.broadcast %29 : vector<1x1x128xf32> to vector<2x16x128xf32>
    %31 = arith.addf %26, %30 : vector<2x16x128xf32>
    %c0_18 = arith.constant 0 : index
    %c0_19 = arith.constant 0 : index
    %c0_20 = arith.constant 0 : index
    %c0_21 = arith.constant 0 : index
    %32 = vector.load %arg4[%c0_18, %c0_19, %c0_20, %c0_21] : memref<2x2x16x128xf32, #tpu.memory_space<vmem>>, vector<1x2x16x128xf32>
    %33 = vector.shape_cast %32 : vector<1x2x16x128xf32> to vector<2x16x128xf32>
    %34 = vector.shape_cast %31 : vector<2x16x128xf32> to vector<1x2x16x128xf32>
    tpu.vector_store %arg4[%c0_18, %c0_19, %c0_20, %c0_21], %34 {strides = array<i32>} : memref<2x2x16x128xf32, #tpu.memory_space<vmem>>, vector<1x2x16x128xf32>,
    %c2 = arith.constant 2 : index
    %c0_22 = arith.constant 0 : index
    %c0_23 = arith.constant 0 : index
    %35 = vector.load %arg2[%c2, %c0_22, %c0_23] : memref<4x1x128xf32, #tpu.memory_space<vmem>>, vector<1x1x128xf32>
    %36 = vector.shape_cast %35 : vector<1x1x128xf32> to vector<1x128xf32>
    %37 = vector.shape_cast %36 : vector<1x128xf32> to vector<1x1x128xf32>
    %38 = vector.broadcast %37 : vector<1x1x128xf32> to vector<2x16x128xf32>
    %39 = arith.mulf %38, %9 : vector<2x16x128xf32>
    %c3 = arith.constant 3 : index
    %c0_24 = arith.constant 0 : index
    %c0_25 = arith.constant 0 : index
    %40 = vector.load %arg2[%c3, %c0_24, %c0_25] : memref<4x1x128xf32, #tpu.memory_space<vmem>>, vector<1x1x128xf32>
    %41 = vector.shape_cast %40 : vector<1x1x128xf32> to vector<1x128xf32>
    %42 = vector.shape_cast %41 : vector<1x128xf32> to vector<1x1x128xf32>
    %43 = vector.broadcast %42 : vector<1x1x128xf32> to vector<2x16x128xf32>
    %44 = arith.mulf %43, %15 : vector<2x16x128xf32>
    %45 = arith.addf %39, %44 : vector<2x16x128xf32>
    %c1_26 = arith.constant 1 : index
    %c0_27 = arith.constant 0 : index
    %c0_28 = arith.constant 0 : index
    %46 = vector.load %arg3[%c1_26, %c0_27, %c0_28] : memref<2x1x128xf32, #tpu.memory_space<vmem>>, vector<1x1x128xf32>
    %47 = vector.shape_cast %46 : vector<1x1x128xf32> to vector<1x128xf32>
    %48 = vector.shape_cast %47 : vector<1x128xf32> to vector<1x1x128xf32>
    %49 = vector.broadcast %48 : vector<1x1x128xf32> to vector<2x16x128xf32>
    %50 = arith.addf %45, %49 : vector<2x16x128xf32>
    %c1_29 = arith.constant 1 : index
    %c0_30 = arith.constant 0 : index
    %c0_31 = arith.constant 0 : index
    %c0_32 = arith.constant 0 : index
    %51 = vector.load %arg4[%c1_29, %c0_30, %c0_31, %c0_32] : memref<2x2x16x128xf32, #tpu.memory_space<vmem>>, vector<1x2x16x128xf32>
    %52 = vector.shape_cast %51 : vector<1x2x16x128xf32> to vector<2x16x128xf32>
    %53 = vector.shape_cast %50 : vector<2x16x128xf32> to vector<1x2x16x128xf32>
    tpu.vector_store %arg4[%c1_29, %c0_30, %c0_31, %c0_32], %53 {strides = array<i32>} : memref<2x2x16x128xf32, #tpu.memory_space<vmem>>, vector<1x2x16x128xf32>,
    return
  }
  func.func @transform_0(%arg0: i32) -> (i32, i32, i32, i32) {
    %c0_i32 = arith.constant 0 : i32
    %c0_i32_0 = arith.constant 0 : i32
    %c0_i32_1 = arith.constant 0 : i32
    %c0_i32_2 = arith.constant 0 : i32
    return %c0_i32, %c0_i32_0, %arg0, %c0_i32_1 : i32, i32, i32, i32
  }
  func.func @transform_1(%arg0: i32) -> (i32, i32, i32) {
    %c0_i32 = arith.constant 0 : i32
    %c0_i32_0 = arith.constant 0 : i32
    %c0_i32_1 = arith.constant 0 : i32
    %c0_i32_2 = arith.constant 0 : i32
    return %c0_i32, %c0_i32_0, %c0_i32_1 : i32, i32, i32
  }
  func.func @transform_2(%arg0: i32) -> (i32, i32, i32) {
    %c0_i32 = arith.constant 0 : i32
    %c0_i32_0 = arith.constant 0 : i32
    %c0_i32_1 = arith.constant 0 : i32
    %c0_i32_2 = arith.constant 0 : i32
    return %c0_i32, %c0_i32_0, %c0_i32_1 : i32, i32, i32
  }
  func.func @transform_3(%arg0: i32) -> (i32, i32, i32, i32) {
    %c0_i32 = arith.constant 0 : i32
    %c0_i32_0 = arith.constant 0 : i32
    %c0_i32_1 = arith.constant 0 : i32
    %c0_i32_2 = arith.constant 0 : i32
    return %c0_i32, %c0_i32_0, %arg0, %c0_i32_1 : i32, i32, i32, i32
  }
}

</mosaic_0001>

<llo_original>
// kernel: custom-call.1
$region0: #{custom-call.1}
  %s0 = inlined_call_operand.hbm [shape: c64[2,64,128], index: 0, kind: input, shape index: {}]
  %s1 = inlined_call_operand.vmem [shape: f32[2,64,128], index: 1, kind: output, shape index: {}]
  %s2 = scalar_lea.hbm %s0, 2048
  $region1: #{custom-call.1} parent=0
    #allocation0 [shape = 's32[1]{0}', space=sflag, size = 0x4, scoped, tag = 'scoped memory for custom-call.1']
    %3 = vsyncpa [#allocation0], 0
    %s4 = sshll.u32 %s1, 4
    %s5 = int_to_ptr.vmem [resolvable:$true] %s4
    %7 = dma.hbm_to_vmem [thread:$0]  %s2, 2048, %s5, [#allocation0]
    %8 = dma.done [#allocation0], 2048
    %9 = vsyncpa [#allocation0], 1

// kernel: custom-call
$region0: #{custom-call}
  %s0 = inlined_call_operand.hbm [shape: c64[2,64,128], index: 0, kind: input, shape index: {}]
  %s1 = inlined_call_operand.vmem [shape: f32[2,64,128], index: 1, kind: output, shape index: {}]
  $region1: #{custom-call} parent=0
    #allocation0 [shape = 's32[1]{0}', space=sflag, size = 0x4, scoped, tag = 'scoped memory for custom-call']
    %2 = vsyncpa [#allocation0], 0
    %s3 = sshll.u32 %s1, 4
    %s4 = int_to_ptr.vmem [resolvable:$true] %s3
    %6 = dma.hbm_to_vmem [thread:$0]  %s0, 2048, %s4, [#allocation0]
    %7 = dma.done [#allocation0], 2048
    %8 = vsyncpa [#allocation0], 1

// kernel: custom-call.2
$region0: #{custom-call.2}
  %s0 = inlined_call_operand.vmem [shape: f32[2,64,128], index: 0, kind: input, shape index: {}]
  %s1 = inlined_call_operand.vmem [shape: f32[2,64,128], index: 1, kind: input, shape index: {}]
  %s2 = inlined_call_operand.hbm [shape: c64[2,64,128], index: 2, kind: output, shape index: {}]
  %s3 = scalar_lea.hbm %s2, 2048
  $region1: #{custom-call.2} parent=0
    #allocation0 [shape = 's32[1]{0}', space=sflag, size = 0x4, scoped, tag = 'scoped memory for custom-call.2']
    %4 = vsyncpa [#allocation0], 0
    %s5 = sshll.u32 %s0, 4
    %s6 = int_to_ptr.vmem [resolvable:$true] %s5
    %8 = dma.vmem_to_hbm [thread:$0]  %s6, 2048, %s2, [#allocation0]
    %9 = dma.done [#allocation0], 2048
    %10 = vsyncpa [#allocation0], 1
  $region2: #{custom-call.2} parent=0
    #allocation1 [shape = 's32[1]{0}', space=sflag, size = 0x4, scoped, tag = 'scoped memory for custom-call.2']
    %11 = vsyncpa [#allocation1], 0
    %s12 = sshll.u32 %s1, 4
    %s13 = int_to_ptr.vmem [resolvable:$true] %s12
    %15 = dma.vmem_to_hbm [thread:$0]  %s13, 2048, %s3, [#allocation1]
    %16 = dma.done [#allocation1], 2048
    %17 = vsyncpa [#allocation1], 1

// kernel: complex_layer_norm.4
$region0: #{complex_layer_norm.4}
  #allocation0 [shape = 'u32[]', space=smem, size = 0x4, offset = 0x4, fixed_abs, tag = 'smem constant byte address 0x4 - core index']
  #allocation1 [shape = 'u32[144,128]{1,0:T(1,128)}', space=vmem, size = 0x12000, scoped, tag = 'internal scratch']
  #allocation2 [shape = 'u32[2048]{0}', space=vmem, size = 0x2000, scoped, tag = 'scoped memory for complex_layer_norm.4']
  #allocation3 [shape = 'u32[2048]{0}', space=vmem, size = 0x2000, scoped, tag = 'scoped memory for complex_layer_norm.4']
  #allocation4 [shape = 'u32[2048]{0}', space=vmem, size = 0x2000, scoped, tag = 'scoped memory for complex_layer_norm.4']
  #allocation5 [shape = 'u32[2048]{0}', space=vmem, size = 0x2000, scoped, tag = 'scoped memory for complex_layer_norm.4']
  #allocation6 [shape = 'u32[2048]{0}', space=vmem, size = 0x2000, scoped, tag = 'scoped memory for complex_layer_norm.4']
  #allocation7 [shape = 'u32[2048]{0}', space=vmem, size = 0x2000, scoped, tag = 'scoped memory for complex_layer_norm.4']
  #allocation8 [shape = 'u32[2048]{0}', space=vmem, size = 0x2000, scoped, tag = 'scoped memory for complex_layer_norm.4']
  #allocation9 [shape = 'u32[2048]{0}', space=vmem, size = 0x2000, scoped, tag = 'scoped memory for complex_layer_norm.4']
  #allocation10 [shape = 'u32[2048]{0}', space=vmem, size = 0x2000, scoped, tag = 'scoped memory for complex_layer_norm.4']
  #allocation11 [shape = 'u32[2048]{0}', space=vmem, size = 0x2000, scoped, tag = 'scoped memory for complex_layer_norm.4']
  %s0 = inlined_call_operand.vmem [shape: f32[4,1,128], index: 0, kind: input, shape index: {}]
  %s1 = inlined_call_operand.vmem [shape: f32[2,1,128], index: 1, kind: input, shape index: {}]
  %s2 = inlined_call_operand.vmem [shape: f32[1,2,64,128], index: 2, kind: input, shape index: {}]
  %s3 = inlined_call_operand.<no memory space> [shape: f32[], index: 3, kind: input, shape index: {}]
  %s4 = inlined_call_operand.vmem [shape: f32[1,2,64,128], index: 4, kind: input, shape index: {}]
  %s5 = inlined_call_operand.vmem [shape: f32[2,2,64,128], index: 5, kind: output, shape index: {}]
  %s6 = sld [smem:[#allocation0]]
  $region83: #{complex_layer_norm.4} parent=0
    _
  %s8 = ssub.s32 1, %s6
  %s9 = scalar_select 0, %s8, %s6
  %v10 = vstv %s3
  %v11 = vstv %s3
  $region1: #{complex_layer_norm.4} parent=0
    #allocation12 [shape = 'u8[65536]{0}', space=vmem, size = 0x10000, scoped, tag = 'output window, operand 0']
    loop: start=0, step=1, limit=6
    $region2: #{complex_layer_norm.4} parent=1 // loop_pre_header
      _
    $region3: #{complex_layer_norm.4} parent=1 // loop_header
      %s13 = sphi 0, %s17
      %p14 = scmp.ge.s32.totalorder %s13, 6
      %s27 = sphi 0, %s29
      %s30 = sphi 0, %s27
      %s31 = sphi 0, %s30
      %s47 = sphi 0, %s31
      %s53 = sphi 0, %s55
      %s56 = sphi 0, %s53
      %s57 = sphi 0, %s56
      %s73 = sphi 0, %s57
      %s77 = sphi 0, %s77
      %s79 = sphi 0, %s77
      %s80 = sphi 0, %s79
      %s94 = sphi 0, %s80
      %s98 = sphi 0, %s98
      %s100 = sphi 0, %s98
      %s101 = sphi 0, %s100
      %s115 = sphi 0, %s101
      %s121 = sphi 0, %s123
      %s124 = sphi 0, %s121
      %s125 = sphi 0, %s124
      %s141 = sphi 0, %s125
    $region4: #{complex_layer_norm.4} parent=1 // loop_header_branch
      %16 = sbr.rel (%p14) target = $region8
    $region5: #{complex_layer_norm.4} parent=1 // loop_body
      %s18 = ssub.s32 %s13, 1
      %s19 = ssub.s32 %s13, 2
      %s20 = sadd.s32 %s13, 1
      %s23 = ssub.s32 0, 0
      %s24 = ssub.s32 %s13, %s20
      %s25 = sor.u32 %s23, %s24
      %p26 = scmp.eq.s32.totalorder %s25, 0
      %s28 = sadd.s32 %s27, 1
      %s29 = scalar_select %p26, %s27, %s28
      %p32 = pneg %p26
      %p33 = scmp.eq.s32.totalorder %s13, 3
      %p34 = por %p32, %p33
      %p35 = scmp.ne.s32.totalorder %s27, %s30
      %p36 = scmp.eq.s32.totalorder %s13, 0
      %p37 = por %p35, %p36
      %p38 = scmp.ne.s32.totalorder %s27, %s30
      %p39 = scmp.eq.s32.totalorder %s18, 3
      %p40 = por %p38, %p39
      %p41 = scmp.ne.s32.totalorder %s30, %s31
      %p42 = scmp.eq.s32.totalorder %s18, 0
      %p43 = por %p41, %p42
      %p44 = scmp.ne.s32.totalorder %s30, %s31
      %p45 = scmp.eq.s32.totalorder %s19, 3
      %p46 = por %p44, %p45
      %p48 = scmp.ne.s32.totalorder %s31, %s47
      %p49 = scmp.eq.s32.totalorder %s19, 0
      %p50 = por %p48, %p49
      %s51 = ssub.s32 %s13, %s20
      %p52 = scmp.eq.s32.totalorder %s51, 0
      %s54 = sadd.s32 %s53, 1
      %s55 = scalar_select %p52, %s53, %s54
      %p58 = pneg %p52
      %p59 = scmp.eq.s32.totalorder %s13, 3
      %p60 = por %p58, %p59
      %p61 = scmp.ne.s32.totalorder %s53, %s56
      %p62 = scmp.eq.s32.totalorder %s13, 0
      %p63 = por %p61, %p62
      %p64 = scmp.ne.s32.totalorder %s53, %s56
      %p65 = scmp.eq.s32.totalorder %s18, 3
      %p66 = por %p64, %p65
      %p67 = scmp.ne.s32.totalorder %s56, %s57
      %p68 = scmp.eq.s32.totalorder %s18, 0
      %p69 = por %p67, %p68
      %p70 = scmp.ne.s32.totalorder %s56, %s57
      %p71 = scmp.eq.s32.totalorder %s19, 3
      %p72 = por %p70, %p71
      %p74 = scmp.ne.s32.totalorder %s57, %s73
      %p75 = scmp.eq.s32.totalorder %s19, 0
      %p76 = por %p74, %p75
      %s78 = sadd.s32 %s77, 1
      %p81 = scmp.eq.s32.totalorder %s13, 3
      %p82 = scmp.ne.s32.totalorder %s77, %s79
      %p83 = scmp.eq.s32.totalorder %s13, 0
      %p84 = por %p82, %p83
      %p85 = scmp.ne.s32.totalorder %s77, %s79
      %p86 = scmp.eq.s32.totalorder %s18, 3
      %p87 = por %p85, %p86
      %p88 = scmp.ne.s32.totalorder %s79, %s80
      %p89 = scmp.eq.s32.totalorder %s18, 0
      %p90 = por %p88, %p89
      %p91 = scmp.ne.s32.totalorder %s79, %s80
      %p92 = scmp.eq.s32.totalorder %s19, 3
      %p93 = por %p91, %p92
      %p95 = scmp.ne.s32.totalorder %s80, %s94
      %p96 = scmp.eq.s32.totalorder %s19, 0
      %p97 = por %p95, %p96
      %s99 = sadd.s32 %s98, 1
      %p102 = scmp.eq.s32.totalorder %s13, 3
      %p103 = scmp.ne.s32.totalorder %s98, %s100
      %p104 = scmp.eq.s32.totalorder %s13, 0
      %p105 = por %p103, %p104
      %p106 = scmp.ne.s32.totalorder %s98, %s100
      %p107 = scmp.eq.s32.totalorder %s18, 3
      %p108 = por %p106, %p107
      %p109 = scmp.ne.s32.totalorder %s100, %s101
      %p110 = scmp.eq.s32.totalorder %s18, 0
      %p111 = por %p109, %p110
      %p112 = scmp.ne.s32.totalorder %s100, %s101
      %p113 = scmp.eq.s32.totalorder %s19, 3
      %p114 = por %p112, %p113
      %p116 = scmp.ne.s32.totalorder %s101, %s115
      %p117 = scmp.eq.s32.totalorder %s19, 0
      %p118 = por %p116, %p117
      %s119 = ssub.s32 %s13, %s20
      %p120 = scmp.eq.s32.totalorder %s119, 0
      %s122 = sadd.s32 %s121, 1
      %s123 = scalar_select %p120, %s121, %s122
      %p126 = pneg %p120
      %p127 = scmp.eq.s32.totalorder %s13, 3
      %p128 = por %p126, %p127
      %p129 = scmp.ne.s32.totalorder %s121, %s124
      %p130 = scmp.eq.s32.totalorder %s13, 0
      %p131 = por %p129, %p130
      %p132 = scmp.ne.s32.totalorder %s121, %s124
      %p133 = scmp.eq.s32.totalorder %s18, 3
      %p134 = por %p132, %p133
      %p135 = scmp.ne.s32.totalorder %s124, %s125
      %p136 = scmp.eq.s32.totalorder %s18, 0
      %p137 = por %p135, %p136
      %p138 = scmp.ne.s32.totalorder %s124, %s125
      %p139 = scmp.eq.s32.totalorder %s19, 3
      %p140 = por %p138, %p139
      %p142 = scmp.ne.s32.totalorder %s125, %s141
      %p143 = scmp.eq.s32.totalorder %s19, 0
      %p144 = por %p142, %p143
      %p145 = scmp.le.s32.totalorder 1, %s13
      %p146 = scmp.lt.s32.totalorder %s13, 5
      %p147 = pnand %p145, %p146
      %p148 = pneg %p147
      // Predicated region
      $region9: #{complex_layer_norm.4} parent=5 // pred_check
        _
      $region10: #{complex_layer_norm.4} parent=5 // pred_check_branch
        %150 = sbr.rel (%p147) target = $region12
      $region11: #{complex_layer_norm.4} parent=5 // pred_region
        %s151 = ssub.s32 %s13, 1
        // Predicated region
        $region13: #{complex_layer_norm.4} parent=11 // pred_check
          %p152 = pneg %p90
        $region14: #{complex_layer_norm.4} parent=11 // pred_check_branch
          %154 = sbr.rel (%p152) target = $region16
        $region15: #{complex_layer_norm.4} parent=11 // pred_region
          _
        $region16: #{complex_layer_norm.4} parent=11 // pred_fallthru
          _
        // Predicated region
        $region17: #{complex_layer_norm.4} parent=11 // pred_check
          %p155 = pneg %p111
        $region18: #{complex_layer_norm.4} parent=11 // pred_check_branch
          %157 = sbr.rel (%p155) target = $region20
        $region19: #{complex_layer_norm.4} parent=11 // pred_region
          _
        $region20: #{complex_layer_norm.4} parent=11 // pred_fallthru
          _
      $region12: #{complex_layer_norm.4} parent=5 // pred_fallthru
        _
      %p158 = scmp.lt.s32.totalorder %s13, 4
      // Predicated region
      $region21: #{complex_layer_norm.4} parent=5 // pred_check
        %p159 = pneg %p158
      $region22: #{complex_layer_norm.4} parent=5 // pred_check_branch
        %161 = sbr.rel (%p159) target = $region24
      $region23: #{complex_layer_norm.4} parent=5 // pred_region
        // Predicated region
        $region25: #{complex_layer_norm.4} parent=23 // pred_check
          %p162 = pneg %p37
        $region26: #{complex_layer_norm.4} parent=23 // pred_check_branch
          %164 = sbr.rel (%p162) target = $region28
        $region27: #{complex_layer_norm.4} parent=23 // pred_region
          %s166 = smul.u32 2, %s13
          %s167 = ssub.s32 1, 0
          %s168 = smul.u32 128, %s167
          %s169 = smul.u32 %s168, 2
          %s170 = smul.u32 %s169, 2
          %p171 = scmp.lt.s32.totalorder 0, 0
          %s172 = scalar_select %p171, 0, 0
          %p173 = scmp.lt.s32.totalorder %s166, 7
          %s174 = scalar_select %p173, %s166, 7
          %s175 = smul.addr %s172, 16
          %s176 = sadd.s32 %s174, %s175
          %s177 = smul.addr %s176, 8
          %s178 = scalar_lea.vmem %s2, %s177
          %s180 = smul.u32 2, %s13
          %s181 = ssub.s32 1, 0
          %s182 = smul.u32 128, %s181
          %s183 = smul.u32 %s182, 2
          %s184 = smul.u32 %s183, 2
        $region28: #{complex_layer_norm.4} parent=23 // pred_fallthru
          _
        // Predicated region
        $region29: #{complex_layer_norm.4} parent=23 // pred_check
          %p185 = pneg %p63
        $region30: #{complex_layer_norm.4} parent=23 // pred_check_branch
          %187 = sbr.rel (%p185) target = $region32
        $region31: #{complex_layer_norm.4} parent=23 // pred_region
          %s188 = smul.u32 2, %s13
          %p189 = scmp.lt.s32.totalorder %s188, 7
          %s190 = scalar_select %p189, %s188, 7
          %s191 = smul.addr %s190, 8
          %s192 = scalar_lea.vmem %s4, %s191
          %s193 = smul.u32 2, %s13
        $region32: #{complex_layer_norm.4} parent=23 // pred_fallthru
          _
      $region24: #{complex_layer_norm.4} parent=5 // pred_fallthru
        _
      %p194 = scmp.le.s32.totalorder 1, %s13
      %p195 = scmp.lt.s32.totalorder %s13, 5
      %p196 = pnand %p194, %p195
      %p197 = pneg %p196
      // Predicated region
      $region33: #{complex_layer_norm.4} parent=5 // pred_check
        _
      $region34: #{complex_layer_norm.4} parent=5 // pred_check_branch
        %199 = sbr.rel (%p196) target = $region36
      $region35: #{complex_layer_norm.4} parent=5 // pred_region
        #allocation13 [shape = 'u8[32768]{0}', space=vmem, size = 0x8000, dematerialized = true, scoped, tag = 'FusionAdapter Buffer %pad_maximum_fusion.1 = f32[2,2,64,128]{3,2,1,0:T(8,128)} fusion(%param_2.4, %param_3, %param_4), kind=kLoop, calls=%fused_computation.clone.clone, metadata={op_name="jit(complex_layer_norm)/concatenate" stack_frame_id=10}']
        %s200 = ssub.s32 %s13, 1
        %s202 = smul.u32 2, %s18
        %s203 = ssub.s32 1, 0
        %s204 = smul.u32 128, %s203
        %s205 = smul.u32 %s204, 2
        %s206 = smul.u32 %s205, 2
        %p207 = scmp.lt.s32.totalorder 0, 0
        %s208 = scalar_select %p207, 0, 0
        %p209 = scmp.lt.s32.totalorder %s202, 7
        %s210 = scalar_select %p209, %s202, 7
        %s211 = smul.addr %s208, 16
        %s212 = sadd.s32 %s210, %s211
        %s213 = smul.addr %s212, 8
        %s214 = scalar_lea.vmem %s2, %s213
        %p215 = pneg %p43
        %p216 = pneg %p40
        %s217 = smul.u32 2, %s18
        %p218 = scmp.lt.s32.totalorder %s217, 7
        %s219 = scalar_select %p218, %s217, 7
        %s220 = smul.addr %s219, 8
        %s221 = scalar_lea.vmem %s4, %s220
        %p222 = pneg %p69
        %p223 = pneg %p66
        %p224 = pneg %p90
        %p225 = pneg %p87
        %p226 = pneg %p111
        %p227 = pneg %p108
        %p228 = pneg %p137
        %p229 = pneg %p134
        %s230 = sand.u32 %s124, 1
        %s231 = sand.u32 %s124, 1
        %s232 = smul.addr %s231, 64
        %s233 = scalar_lea.vmem [#allocation12], %s232
        %s235 = smul.u32 2, %s18
        %s236 = ssub.s32 1, 0
        %s237 = smul.u32 128, %s236
        %s238 = smul.u32 %s237, 2
        %s239 = smul.u32 %s238, 2
        %p240 = scmp.lt.s32.totalorder 0, 0
        %s241 = scalar_select %p240, 0, 0
        %p242 = scmp.lt.s32.totalorder %s235, 7
        %s243 = scalar_select %p242, %s235, 7
        %s244 = smul.addr %s241, 16
        %s245 = sadd.s32 %s243, %s244
        %s246 = smul.addr %s245, 8
        %s247 = scalar_lea.vmem %s2, %s246
        %s249 = smul.u32 2, %s18
        %s250 = ssub.s32 1, 0
        %s251 = smul.u32 128, %s250
        %s252 = smul.u32 %s251, 2
        %s253 = smul.u32 %s252, 2
        %s254 = smul.u32 2, %s18
        %p255 = scmp.lt.s32.totalorder %s254, 7
        %s256 = scalar_select %p255, %s254, 7
        %s257 = smul.addr %s256, 8
        %s258 = scalar_lea.vmem %s4, %s257
        %s259 = smul.u32 2, %s18
        %s260 = smul.u32 2, %s18
        %s261 = ssub.s32 0, 0
        %p262 = scmp.lt.s32.totalorder %s261, 0
        %s263 = scalar_select %p262, 0, 255
        %v264 = vld [vmem:[%s247] sm:%s263]
        %s265 = smul.u32 2, %s18
        %v266 = vld [vmem:[%s258] sm:$0xff]
        %267 = xla_tuple %v266, %v10
        %268 = xla_tuple %267
        %v269 = vmax.f32 %v266, %v10
        %270 = xla_tuple %v269
        %272 = vst [vmem:[#allocation13] sm:$0xff] %v269
        %s273 = scalar_lea.vmem %s247, 8
        %s274 = ssub.s32 0, 0
        %p275 = scmp.lt.s32.totalorder %s274, 0
        %s276 = scalar_select %p275, 0, 255
        %v277 = vld [vmem:[%s273] sm:%s276]
        %s278 = scalar_lea.vmem %s258, 8
        %v279 = vld [vmem:[%s278] sm:$0xff]
        %280 = xla_tuple %v279, %v10
        %281 = xla_tuple %280
        %v282 = vmax.f32 %v279, %v10
        %283 = xla_tuple %v282
        %s284 = scalar_lea.vmem [#allocation13], 8
        %286 = vst [vmem:[%s284] sm:$0xff] %v282
        %s287 = scalar_lea.vmem %s247, 64
        %s288 = ssub.s32 0, 0
        %p289 = scmp.lt.s32.totalorder %s288, 0
        %s290 = scalar_select %p289, 0, 255
        %v291 = vld [vmem:[%s287] sm:%s290]
        %s292 = scalar_lea.vmem %s258, 64
        %v293 = vld [vmem:[%s292] sm:$0xff]
        %294 = xla_tuple %v293, %v10
        %295 = xla_tuple %294
        %v296 = vmax.f32 %v293, %v10
        %297 = xla_tuple %v296
        %s298 = scalar_lea.vmem [#allocation13], 16
        %300 = vst [vmem:[%s298] sm:$0xff] %v296
        %s301 = scalar_lea.vmem %s247, 72
        %s302 = ssub.s32 0, 0
        %p303 = scmp.lt.s32.totalorder %s302, 0
        %s304 = scalar_select %p303, 0, 255
        %v305 = vld [vmem:[%s301] sm:%s304]
        %s306 = scalar_lea.vmem %s258, 72
        %v307 = vld [vmem:[%s306] sm:$0xff]
        %308 = xla_tuple %v307, %v10
        %309 = xla_tuple %308
        %v310 = vmax.f32 %v307, %v10
        %311 = xla_tuple %v310
        %s312 = scalar_lea.vmem [#allocation13], 24
        %314 = vst [vmem:[%s312] sm:$0xff] %v310
        %315 = xla_tuple %v11, %v264
        %316 = xla_tuple %315
        %v317 = vmax.f32 %v11, %v264
        %318 = xla_tuple %v317
        %s319 = scalar_lea.vmem [#allocation13], 32
        %321 = vst [vmem:[%s319] sm:$0xff] %v317
        %s322 = scalar_lea.vmem %s247, 8
        %323 = xla_tuple %v11, %v277
        %324 = xla_tuple %323
        %v325 = vmax.f32 %v11, %v277
        %326 = xla_tuple %v325
        %s327 = scalar_lea.vmem [#allocation13], 40
        %329 = vst [vmem:[%s327] sm:$0xff] %v325
        %s330 = scalar_lea.vmem %s247, 64
        %331 = xla_tuple %v11, %v291
        %332 = xla_tuple %331
        %v333 = vmax.f32 %v11, %v291
        %334 = xla_tuple %v333
        %s335 = scalar_lea.vmem [#allocation13], 48
        %337 = vst [vmem:[%s335] sm:$0xff] %v333
        %s338 = scalar_lea.vmem %s247, 72
        %339 = xla_tuple %v11, %v305
        %340 = xla_tuple %339
        %v341 = vmax.f32 %v11, %v305
        %342 = xla_tuple %v341
        %s343 = scalar_lea.vmem [#allocation13], 56
        %345 = vst [vmem:[%s343] sm:$0xff] %v341
        %v346 = vld [vmem:[#allocation13] sm:$0xff]
        %v347 = vld [vmem:[#allocation13 + $0x8] sm:$0xff]
        %v348 = vld [vmem:[#allocation13 + $0x10] sm:$0xff]
        %v349 = vld [vmem:[#allocation13 + $0x18] sm:$0xff]
        %s350 = scalar_lea.vmem [#allocation13], 32
        %v351 = vld [vmem:[%s350] sm:$0xff]
        %v352 = vld [vmem:[%s350 + $0x8] sm:$0xff]
        %v353 = vld [vmem:[%s350 + $0x10] sm:$0xff]
        %v354 = vld [vmem:[%s350 + $0x18] sm:$0xff]
        %355 = vadd.xlane.f32.xlu0 %v346
        %v356 = vpop.xlane.xlu0 %355
        %357 = vadd.xlane.f32.xlu0 %v347
        %v358 = vpop.xlane.xlu0 %357
        %359 = vadd.xlane.f32.xlu0 %v348
        %v360 = vpop.xlane.xlu0 %359
        %361 = vadd.xlane.f32.xlu0 %v349
        %v362 = vpop.xlane.xlu0 %361
        %v363 = vrcp.pop 128.0
        %v364 = vmul.f32 %v356, %v363
        %v365 = vmul.f32 %v358, %v363
        %v366 = vmul.f32 %v360, %v363
        %v367 = vmul.f32 %v362, %v363
        %v368 = vsub.f32 %v346, %v364
        %v369 = vsub.f32 %v347, %v365
        %v370 = vsub.f32 %v348, %v366
        %v371 = vsub.f32 %v349, %v367
        %372 = vadd.xlane.f32.xlu0 %v351
        %v373 = vpop.xlane.xlu0 %372
        %374 = vadd.xlane.f32.xlu0 %v352
        %v375 = vpop.xlane.xlu0 %374
        %376 = vadd.xlane.f32.xlu0 %v353
        %v377 = vpop.xlane.xlu0 %376
        %378 = vadd.xlane.f32.xlu0 %v354
        %v379 = vpop.xlane.xlu0 %378
        %v380 = vmul.f32 %v373, %v363
        %v381 = vmul.f32 %v375, %v363
        %v382 = vmul.f32 %v377, %v363
        %v383 = vmul.f32 %v379, %v363
        %v384 = vsub.f32 %v351, %v380
        %v385 = vsub.f32 %v352, %v381
        %v386 = vsub.f32 %v353, %v382
        %v387 = vsub.f32 %v354, %v383
        %v388 = vld [vmem:[%s0] sm:$0x1]
        %v390 = vlaneseq
        %v391 = vshrl.u32 %v390, 7
        %v392 = vsub.s32 0, %v391
        %v393 = vrot.slane %v388, %v392
        %v395 = vmul.f32 %v393, %v368
        %v396 = vmul.f32 %v393, %v369
        %v397 = vmul.f32 %v393, %v370
        %v398 = vmul.f32 %v393, %v371
        %s399 = scalar_lea.vmem %s0, 1
        %v400 = vld [vmem:[%s399] sm:$0x1]
        %v402 = vlaneseq
        %v403 = vshrl.u32 %v402, 7
        %v404 = vsub.s32 0, %v403
        %v405 = vrot.slane %v400, %v404
        %v407 = vmul.f32 %v405, %v384
        %v408 = vmul.f32 %v405, %v385
        %v409 = vmul.f32 %v405, %v386
        %v410 = vmul.f32 %v405, %v387
        %v411 = vadd.f32 %v395, %v407
        %v412 = vadd.f32 %v396, %v408
        %v413 = vadd.f32 %v397, %v409
        %v414 = vadd.f32 %v398, %v410
        %v415 = vld [vmem:[%s1] sm:$0x1]
        %v417 = vlaneseq
        %v418 = vshrl.u32 %v417, 7
        %v419 = vsub.s32 0, %v418
        %v420 = vrot.slane %v415, %v419
        %v422 = vadd.f32 %v411, %v420
        %v423 = vadd.f32 %v412, %v420
        %v424 = vadd.f32 %v413, %v420
        %v425 = vadd.f32 %v414, %v420
        %426 = vst [vmem:[%s233] sm:$0xff] %v422
        %427 = vst [vmem:[%s233 + $0x8] sm:$0xff] %v423
        %428 = vst [vmem:[%s233 + $0x10] sm:$0xff] %v424
        %429 = vst [vmem:[%s233 + $0x18] sm:$0xff] %v425
        %s430 = scalar_lea.vmem %s0, 2
        %v431 = vld [vmem:[%s430] sm:$0x1]
        %v433 = vlaneseq
        %v434 = vshrl.u32 %v433, 7
        %v435 = vsub.s32 0, %v434
        %v436 = vrot.slane %v431, %v435
        %v438 = vmul.f32 %v436, %v368
        %v439 = vmul.f32 %v436, %v369
        %v440 = vmul.f32 %v436, %v370
        %v441 = vmul.f32 %v436, %v371
        %s442 = scalar_lea.vmem %s0, 3
        %v443 = vld [vmem:[%s442] sm:$0x1]
        %v445 = vlaneseq
        %v446 = vshrl.u32 %v445, 7
        %v447 = vsub.s32 0, %v446
        %v448 = vrot.slane %v443, %v447
        %v450 = vmul.f32 %v448, %v384
        %v451 = vmul.f32 %v448, %v385
        %v452 = vmul.f32 %v448, %v386
        %v453 = vmul.f32 %v448, %v387
        %v454 = vadd.f32 %v438, %v450
        %v455 = vadd.f32 %v439, %v451
        %v456 = vadd.f32 %v440, %v452
        %v457 = vadd.f32 %v441, %v453
        %s458 = scalar_lea.vmem %s1, 1
        %v459 = vld [vmem:[%s458] sm:$0x1]
        %v461 = vlaneseq
        %v462 = vshrl.u32 %v461, 7
        %v463 = vsub.s32 0, %v462
        %v464 = vrot.slane %v459, %v463
        %v466 = vadd.f32 %v454, %v464
        %v467 = vadd.f32 %v455, %v464
        %v468 = vadd.f32 %v456, %v464
        %v469 = vadd.f32 %v457, %v464
        %s470 = scalar_lea.vmem %s233, 32 [#allocation12]
        %471 = vst [vmem:[%s470] sm:$0xff] %v466
        %472 = vst [vmem:[%s470 + $0x8] sm:$0xff] %v467
        %473 = vst [vmem:[%s470 + $0x10] sm:$0xff] %v468
        %474 = vst [vmem:[%s470 + $0x18] sm:$0xff] %v469
        %s475 = sand.u32 %s124, 1
        %s476 = sand.u32 %s124, 1
        %s477 = smul.addr %s476, 64
        %s478 = scalar_lea.vmem [#allocation12], %s477
        // Predicated region
        $region37: #{complex_layer_norm.4} parent=35 // pred_check
          %p479 = pneg %p134
        $region38: #{complex_layer_norm.4} parent=35 // pred_check_branch
          %481 = sbr.rel (%p479) target = $region40
        $region39: #{complex_layer_norm.4} parent=35 // pred_region
          %s482 = smul.u32 2, %s18
          %s483 = smul.addr %s482, 8
          %s484 = scalar_lea.vmem %s5, %s483
          // Predicated region
          $region41: #{complex_layer_norm.4} parent=39 // pred_check
            _
          $region42: #{complex_layer_norm.4} parent=39 // pred_check_branch
            %486 = sbr.rel (0) target = $region44
          $region43: #{complex_layer_norm.4} parent=39 // pred_region
            // Predicated region
            $region45: #{complex_layer_norm.4} parent=43 // pred_check
              _
            $region46: #{complex_layer_norm.4} parent=43 // pred_check_branch
              %488 = sbr.rel (0) target = $region48
            $region47: #{complex_layer_norm.4} parent=43 // pred_region
              // Predicated region
              $region60: #{complex_layer_norm.4} parent=47 // pred_check
                _
              $region61: #{complex_layer_norm.4} parent=47 // pred_check_branch
                %517 = sbr.rel (0) target = $region63
              $region62: #{complex_layer_norm.4} parent=47 // pred_region
                loop: start=0, step=1, limit=1
                $region64: #{complex_layer_norm.4} parent=62 // loop_pre_header
                  _
                $region65: #{complex_layer_norm.4} parent=62 // loop_header
                  %s519 = sphi 0, %s523
                  %p520 = scmp.ge.s32.totalorder %s519, 1
                  %s524 = sphi %s478, %s478
                  %s525 = sphi %s484, %s484
                $region66: #{complex_layer_norm.4} parent=62 // loop_header_branch
                  %522 = sbr.rel (%p520) target = $region70
                $region67: #{complex_layer_norm.4} parent=62 // loop_body
                  %v526 = vld [vmem:[%s524] sm:$0xff]
                  %527 = vst [vmem:[%s525] sm:$0xff] %v526
                  %v528 = vld [vmem:[%s524 + $0x8] sm:$0xff]
                  %529 = vst [vmem:[%s525 + $0x8] sm:$0xff] %v528
                  %v530 = vld [vmem:[%s524 + $0x10] sm:$0xff]
                  %531 = vst [vmem:[%s525 + $0x40] sm:$0xff] %v530
                  %v532 = vld [vmem:[%s524 + $0x18] sm:$0xff]
                  %533 = vst [vmem:[%s525 + $0x48] sm:$0xff] %v532
                  %v534 = vld [vmem:[%s524 + $0x20] sm:$0xff]
                  %535 = vst [vmem:[%s525 + $0x80] sm:$0xff] %v534
                  %v536 = vld [vmem:[%s524 + $0x28] sm:$0xff]
                  %537 = vst [vmem:[%s525 + $0x88] sm:$0xff] %v536
                  %v538 = vld [vmem:[%s524 + $0x30] sm:$0xff]
                  %539 = vst [vmem:[%s525 + $0xc0] sm:$0xff] %v538
                  %v540 = vld [vmem:[%s524 + $0x38] sm:$0xff]
                  %541 = vst [vmem:[%s525 + $0xc8] sm:$0xff] %v540
                $region68: #{complex_layer_norm.4} parent=62 // loop_footer
                  %s523 = sadd.s32 1, %s519
                $region69: #{complex_layer_norm.4} parent=62 // loop_footer_branch
                  %518 = sbr.rel target = $region65
                $region70: #{complex_layer_norm.4} parent=62 // loop_exit
                  _
              $region63: #{complex_layer_norm.4} parent=47 // pred_fallthru
                _
              // Predicated region
              $region71: #{complex_layer_norm.4} parent=47 // pred_check
                _
              $region72: #{complex_layer_norm.4} parent=47 // pred_check_branch
                %543 = sbr.rel target = $region74
              $region73: #{complex_layer_norm.4} parent=47 // pred_region
                _
              $region74: #{complex_layer_norm.4} parent=47 // pred_fallthru
                _
            $region48: #{complex_layer_norm.4} parent=43 // pred_fallthru
              _
            // Predicated region
            $region49: #{complex_layer_norm.4} parent=43 // pred_check
              _
            $region50: #{complex_layer_norm.4} parent=43 // pred_check_branch
              %490 = sbr.rel target = $region52
            $region51: #{complex_layer_norm.4} parent=43 // pred_region
              loop: start=0, step=1, limit=1
              $region53: #{complex_layer_norm.4} parent=51 // loop_pre_header
                _
              $region54: #{complex_layer_norm.4} parent=51 // loop_header
                %s493 = sphi 0, %s497
                %p494 = scmp.ge.s32.totalorder %s493, 1
                %s498 = sphi %s478, %s478
                %s499 = sphi %s484, %s484
              $region55: #{complex_layer_norm.4} parent=51 // loop_header_branch
                %496 = sbr.rel (%p494) target = $region59
              $region56: #{complex_layer_norm.4} parent=51 // loop_body
                %v500 = vld [vmem:[%s498] sm:$0xff]
                %501 = vst [vmem:[%s499] sm:$0xff] %v500
                %v502 = vld [vmem:[%s498 + $0x8] sm:$0xff]
                %503 = vst [vmem:[%s499 + $0x8] sm:$0xff] %v502
                %v504 = vld [vmem:[%s498 + $0x10] sm:$0xff]
                %505 = vst [vmem:[%s499 + $0x40] sm:$0xff] %v504
                %v506 = vld [vmem:[%s498 + $0x18] sm:$0xff]
                %507 = vst [vmem:[%s499 + $0x48] sm:$0xff] %v506
                %v508 = vld [vmem:[%s498 + $0x20] sm:$0xff]
                %509 = vst [vmem:[%s499 + $0x80] sm:$0xff] %v508
                %v510 = vld [vmem:[%s498 + $0x28] sm:$0xff]
                %511 = vst [vmem:[%s499 + $0x88] sm:$0xff] %v510
                %v512 = vld [vmem:[%s498 + $0x30] sm:$0xff]
                %513 = vst [vmem:[%s499 + $0xc0] sm:$0xff] %v512
                %v514 = vld [vmem:[%s498 + $0x38] sm:$0xff]
                %515 = vst [vmem:[%s499 + $0xc8] sm:$0xff] %v514
              $region57: #{complex_layer_norm.4} parent=51 // loop_footer
                %s497 = sadd.s32 1, %s493
              $region58: #{complex_layer_norm.4} parent=51 // loop_footer_branch
                %492 = sbr.rel target = $region54
              $region59: #{complex_layer_norm.4} parent=51 // loop_exit
                _
            $region52: #{complex_layer_norm.4} parent=43 // pred_fallthru
              _
          $region44: #{complex_layer_norm.4} parent=39 // pred_fallthru
            _
          %544 = vnop
        $region40: #{complex_layer_norm.4} parent=35 // pred_fallthru
          _
      $region36: #{complex_layer_norm.4} parent=5 // pred_fallthru
        _
      %p545 = scmp.le.s32.totalorder 2, %s13
      // Predicated region
      $region75: #{complex_layer_norm.4} parent=5 // pred_check
        %p546 = pneg %p545
      $region76: #{complex_layer_norm.4} parent=5 // pred_check_branch
        %548 = sbr.rel (%p546) target = $region78
      $region77: #{complex_layer_norm.4} parent=5 // pred_region
        %s549 = ssub.s32 %s13, 2
        // Predicated region
        $region79: #{complex_layer_norm.4} parent=77 // pred_check
          %p550 = pneg %p140
        $region80: #{complex_layer_norm.4} parent=77 // pred_check_branch
          %552 = sbr.rel (%p550) target = $region82
        $region81: #{complex_layer_norm.4} parent=77 // pred_region
          %s553 = sand.u32 %s125, 1
          %s554 = sand.u32 %s125, 1
          %s555 = smul.addr %s554, 64
          %s556 = scalar_lea.vmem [#allocation12], %s555
        $region82: #{complex_layer_norm.4} parent=77 // pred_fallthru
          _
      $region78: #{complex_layer_norm.4} parent=5 // pred_fallthru
        _
    $region6: #{complex_layer_norm.4} parent=1 // loop_footer
      %s17 = sadd.s32 1, %s13
    $region7: #{complex_layer_norm.4} parent=1 // loop_footer_branch
      %12 = sbr.rel target = $region3
    $region8: #{complex_layer_norm.4} parent=1 // loop_exit
      _

// kernel: complex_layer_norm.5
$region0: #{complex_layer_norm.5}
  #allocation0 [shape = 'u32[]', space=smem, size = 0x4, offset = 0x4, fixed_abs, tag = 'smem constant byte address 0x4 - core index']
  #allocation1 [shape = 'u32[144,128]{1,0:T(1,128)}', space=vmem, size = 0x12000, scoped, tag = 'internal scratch']
  #allocation2 [shape = 'u32[2048]{0}', space=vmem, size = 0x2000, scoped, tag = 'scoped memory for complex_layer_norm.5']
  #allocation3 [shape = 'u32[2048]{0}', space=vmem, size = 0x2000, scoped, tag = 'scoped memory for complex_layer_norm.5']
  #allocation4 [shape = 'u32[2048]{0}', space=vmem, size = 0x2000, scoped, tag = 'scoped memory for complex_layer_norm.5']
  #allocation5 [shape = 'u32[2048]{0}', space=vmem, size = 0x2000, scoped, tag = 'scoped memory for complex_layer_norm.5']
  #allocation6 [shape = 'u32[2048]{0}', space=vmem, size = 0x2000, scoped, tag = 'scoped memory for complex_layer_norm.5']
  #allocation7 [shape = 'u32[2048]{0}', space=vmem, size = 0x2000, scoped, tag = 'scoped memory for complex_layer_norm.5']
  #allocation8 [shape = 'u32[2048]{0}', space=vmem, size = 0x2000, scoped, tag = 'scoped memory for complex_layer_norm.5']
  #allocation9 [shape = 'u32[2048]{0}', space=vmem, size = 0x2000, scoped, tag = 'scoped memory for complex_layer_norm.5']
  #allocation10 [shape = 'u32[2048]{0}', space=vmem, size = 0x2000, scoped, tag = 'scoped memory for complex_layer_norm.5']
  #allocation11 [shape = 'u32[2048]{0}', space=vmem, size = 0x2000, scoped, tag = 'scoped memory for complex_layer_norm.5']
  %s0 = inlined_call_operand.vmem [shape: f32[2,1,128], index: 0, kind: input, shape index: {}]
  %s1 = inlined_call_operand.vmem [shape: f32[1,2,64,128], index: 1, kind: input, shape index: {}]
  %s2 = inlined_call_operand.<no memory space> [shape: f32[], index: 2, kind: input, shape index: {}]
  %s3 = inlined_call_operand.vmem [shape: f32[1,2,64,128], index: 3, kind: input, shape index: {}]
  %s4 = inlined_call_operand.vmem [shape: f32[4,1,128], index: 4, kind: output, shape index: {}]
  %s5 = sld [smem:[#allocation0]]
  $region53: #{complex_layer_norm.5} parent=0
    _
  %s7 = ssub.s32 1, %s5
  %s8 = scalar_select 0, %s7, %s5
  %v9 = vstv %s2
  %v10 = vstv %s2
  loop: start=0, step=1, limit=6
  $region2: #{complex_layer_norm.5} parent=0 // loop_pre_header
    _
  $region3: #{complex_layer_norm.5} parent=0 // loop_header
    %s12 = sphi 0, %s16
    %p13 = scmp.ge.s32.totalorder %s12, 6
    %s26 = sphi 0, %s28
    %s29 = sphi 0, %s26
    %s30 = sphi 0, %s29
    %s46 = sphi 0, %s30
    %s52 = sphi 0, %s54
    %s55 = sphi 0, %s52
    %s56 = sphi 0, %s55
    %s72 = sphi 0, %s56
    %s76 = sphi 0, %s76
    %s78 = sphi 0, %s76
    %s79 = sphi 0, %s78
    %s93 = sphi 0, %s79
    %s97 = sphi 0, %s97
    %s99 = sphi 0, %s97
    %s100 = sphi 0, %s99
    %s114 = sphi 0, %s100
  $region4: #{complex_layer_norm.5} parent=0 // loop_header_branch
    %15 = sbr.rel (%p13) target = $region8
  $region5: #{complex_layer_norm.5} parent=0 // loop_body
    %s17 = ssub.s32 %s12, 1
    %s18 = ssub.s32 %s12, 2
    %s19 = sadd.s32 %s12, 1
    %s22 = ssub.s32 0, 0
    %s23 = ssub.s32 %s12, %s19
    %s24 = sor.u32 %s22, %s23
    %p25 = scmp.eq.s32.totalorder %s24, 0
    %s27 = sadd.s32 %s26, 1
    %s28 = scalar_select %p25, %s26, %s27
    %p31 = pneg %p25
    %p32 = scmp.eq.s32.totalorder %s12, 3
    %p33 = por %p31, %p32
    %p34 = scmp.ne.s32.totalorder %s26, %s29
    %p35 = scmp.eq.s32.totalorder %s12, 0
    %p36 = por %p34, %p35
    %p37 = scmp.ne.s32.totalorder %s26, %s29
    %p38 = scmp.eq.s32.totalorder %s17, 3
    %p39 = por %p37, %p38
    %p40 = scmp.ne.s32.totalorder %s29, %s30
    %p41 = scmp.eq.s32.totalorder %s17, 0
    %p42 = por %p40, %p41
    %p43 = scmp.ne.s32.totalorder %s29, %s30
    %p44 = scmp.eq.s32.totalorder %s18, 3
    %p45 = por %p43, %p44
    %p47 = scmp.ne.s32.totalorder %s30, %s46
    %p48 = scmp.eq.s32.totalorder %s18, 0
    %p49 = por %p47, %p48
    %s50 = ssub.s32 %s12, %s19
    %p51 = scmp.eq.s32.totalorder %s50, 0
    %s53 = sadd.s32 %s52, 1
    %s54 = scalar_select %p51, %s52, %s53
    %p57 = pneg %p51
    %p58 = scmp.eq.s32.totalorder %s12, 3
    %p59 = por %p57, %p58
    %p60 = scmp.ne.s32.totalorder %s52, %s55
    %p61 = scmp.eq.s32.totalorder %s12, 0
    %p62 = por %p60, %p61
    %p63 = scmp.ne.s32.totalorder %s52, %s55
    %p64 = scmp.eq.s32.totalorder %s17, 3
    %p65 = por %p63, %p64
    %p66 = scmp.ne.s32.totalorder %s55, %s56
    %p67 = scmp.eq.s32.totalorder %s17, 0
    %p68 = por %p66, %p67
    %p69 = scmp.ne.s32.totalorder %s55, %s56
    %p70 = scmp.eq.s32.totalorder %s18, 3
    %p71 = por %p69, %p70
    %p73 = scmp.ne.s32.totalorder %s56, %s72
    %p74 = scmp.eq.s32.totalorder %s18, 0
    %p75 = por %p73, %p74
    %s77 = sadd.s32 %s76, 1
    %p80 = scmp.eq.s32.totalorder %s12, 3
    %p81 = scmp.ne.s32.totalorder %s76, %s78
    %p82 = scmp.eq.s32.totalorder %s12, 0
    %p83 = por %p81, %p82
    %p84 = scmp.ne.s32.totalorder %s76, %s78
    %p85 = scmp.eq.s32.totalorder %s17, 3
    %p86 = por %p84, %p85
    %p87 = scmp.ne.s32.totalorder %s78, %s79
    %p88 = scmp.eq.s32.totalorder %s17, 0
    %p89 = por %p87, %p88
    %p90 = scmp.ne.s32.totalorder %s78, %s79
    %p91 = scmp.eq.s32.totalorder %s18, 3
    %p92 = por %p90, %p91
    %p94 = scmp.ne.s32.totalorder %s79, %s93
    %p95 = scmp.eq.s32.totalorder %s18, 0
    %p96 = por %p94, %p95
    %s98 = sadd.s32 %s97, 1
    %p101 = scmp.eq.s32.totalorder %s12, 3
    %p102 = scmp.ne.s32.totalorder %s97, %s99
    %p103 = scmp.eq.s32.totalorder %s12, 0
    %p104 = por %p102, %p103
    %p105 = scmp.ne.s32.totalorder %s97, %s99
    %p106 = scmp.eq.s32.totalorder %s17, 3
    %p107 = por %p105, %p106
    %p108 = scmp.ne.s32.totalorder %s99, %s100
    %p109 = scmp.eq.s32.totalorder %s17, 0
    %p110 = por %p108, %p109
    %p111 = scmp.ne.s32.totalorder %s99, %s100
    %p112 = scmp.eq.s32.totalorder %s18, 3
    %p113 = por %p111, %p112
    %p115 = scmp.ne.s32.totalorder %s100, %s114
    %p116 = scmp.eq.s32.totalorder %s18, 0
    %p117 = por %p115, %p116
    %p118 = scmp.le.s32.totalorder 1, %s12
    %p119 = scmp.lt.s32.totalorder %s12, 5
    %p120 = pnand %p118, %p119
    %p121 = pneg %p120
    // Predicated region
    $region9: #{complex_layer_norm.5} parent=5 // pred_check
      _
    $region10: #{complex_layer_norm.5} parent=5 // pred_check_branch
      %123 = sbr.rel (%p120) target = $region12
    $region11: #{complex_layer_norm.5} parent=5 // pred_region
      %s124 = ssub.s32 %s12, 1
      // Predicated region
      $region13: #{complex_layer_norm.5} parent=11 // pred_check
        %p125 = pneg %p89
      $region14: #{complex_layer_norm.5} parent=11 // pred_check_branch
        %127 = sbr.rel (%p125) target = $region16
      $region15: #{complex_layer_norm.5} parent=11 // pred_region
        _
      $region16: #{complex_layer_norm.5} parent=11 // pred_fallthru
        _
    $region12: #{complex_layer_norm.5} parent=5 // pred_fallthru
      _
    %p128 = scmp.lt.s32.totalorder %s12, 4
    // Predicated region
    $region17: #{complex_layer_norm.5} parent=5 // pred_check
      %p129 = pneg %p128
    $region18: #{complex_layer_norm.5} parent=5 // pred_check_branch
      %131 = sbr.rel (%p129) target = $region20
    $region19: #{complex_layer_norm.5} parent=5 // pred_region
      // Predicated region
      $region21: #{complex_layer_norm.5} parent=19 // pred_check
        %p132 = pneg %p36
      $region22: #{complex_layer_norm.5} parent=19 // pred_check_branch
        %134 = sbr.rel (%p132) target = $region24
      $region23: #{complex_layer_norm.5} parent=19 // pred_region
        %s136 = smul.u32 2, %s12
        %s137 = ssub.s32 1, 0
        %s138 = smul.u32 128, %s137
        %s139 = smul.u32 %s138, 2
        %s140 = smul.u32 %s139, 2
        %p141 = scmp.lt.s32.totalorder 0, 0
        %s142 = scalar_select %p141, 0, 0
        %p143 = scmp.lt.s32.totalorder %s136, 7
        %s144 = scalar_select %p143, %s136, 7
        %s145 = smul.addr %s142, 16
        %s146 = sadd.s32 %s144, %s145
        %s147 = smul.addr %s146, 8
        %s148 = scalar_lea.vmem %s1, %s147
        %s150 = smul.u32 2, %s12
        %s151 = ssub.s32 1, 0
        %s152 = smul.u32 128, %s151
        %s153 = smul.u32 %s152, 2
        %s154 = smul.u32 %s153, 2
      $region24: #{complex_layer_norm.5} parent=19 // pred_fallthru
        _
      // Predicated region
      $region25: #{complex_layer_norm.5} parent=19 // pred_check
        %p155 = pneg %p62
      $region26: #{complex_layer_norm.5} parent=19 // pred_check_branch
        %157 = sbr.rel (%p155) target = $region28
      $region27: #{complex_layer_norm.5} parent=19 // pred_region
        %s158 = smul.u32 2, %s12
        %p159 = scmp.lt.s32.totalorder %s158, 7
        %s160 = scalar_select %p159, %s158, 7
        %s161 = smul.addr %s160, 8
        %s162 = scalar_lea.vmem %s3, %s161
        %s163 = smul.u32 2, %s12
      $region28: #{complex_layer_norm.5} parent=19 // pred_fallthru
        _
    $region20: #{complex_layer_norm.5} parent=5 // pred_fallthru
      _
    %p164 = scmp.le.s32.totalorder 1, %s12
    %p165 = scmp.lt.s32.totalorder %s12, 5
    %p166 = pnand %p164, %p165
    %p167 = pneg %p166
    // Predicated region
    $region29: #{complex_layer_norm.5} parent=5 // pred_check
      _
    $region30: #{complex_layer_norm.5} parent=5 // pred_check_branch
      %169 = sbr.rel (%p166) target = $region32
    $region31: #{complex_layer_norm.5} parent=5 // pred_region
      #allocation12 [shape = 'u8[32768]{0}', space=vmem, size = 0x8000, dematerialized = true, scoped, tag = 'FusionAdapter Buffer %pad_maximum_fusion.2 = f32[2,2,64,128]{3,2,1,0:T(8,128)} fusion(%param_1.8, %param_2.6, %param_3.1), kind=kLoop, calls=%fused_computation.clone.1.clone, metadata={op_name="jit(complex_layer_norm)/concatenate" stack_frame_id=10}']
      %s170 = ssub.s32 %s12, 1
      %s172 = smul.u32 2, %s17
      %s173 = ssub.s32 1, 0
      %s174 = smul.u32 128, %s173
      %s175 = smul.u32 %s174, 2
      %s176 = smul.u32 %s175, 2
      %p177 = scmp.lt.s32.totalorder 0, 0
      %s178 = scalar_select %p177, 0, 0
      %p179 = scmp.lt.s32.totalorder %s172, 7
      %s180 = scalar_select %p179, %s172, 7
      %s181 = smul.addr %s178, 16
      %s182 = sadd.s32 %s180, %s181
      %s183 = smul.addr %s182, 8
      %s184 = scalar_lea.vmem %s1, %s183
      %p185 = pneg %p42
      %p186 = pneg %p39
      %s187 = smul.u32 2, %s17
      %p188 = scmp.lt.s32.totalorder %s187, 7
      %s189 = scalar_select %p188, %s187, 7
      %s190 = smul.addr %s189, 8
      %s191 = scalar_lea.vmem %s3, %s190
      %p192 = pneg %p68
      %p193 = pneg %p65
      %p194 = pneg %p89
      %p195 = pneg %p86
      %p196 = pneg %p110
      %p197 = pneg %p107
      %s199 = smul.u32 2, %s17
      %s200 = ssub.s32 1, 0
      %s201 = smul.u32 128, %s200
      %s202 = smul.u32 %s201, 2
      %s203 = smul.u32 %s202, 2
      %p204 = scmp.lt.s32.totalorder 0, 0
      %s205 = scalar_select %p204, 0, 0
      %p206 = scmp.lt.s32.totalorder %s199, 7
      %s207 = scalar_select %p206, %s199, 7
      %s208 = smul.addr %s205, 16
      %s209 = sadd.s32 %s207, %s208
      %s210 = smul.addr %s209, 8
      %s211 = scalar_lea.vmem %s1, %s210
      %s213 = smul.u32 2, %s17
      %s214 = ssub.s32 1, 0
      %s215 = smul.u32 128, %s214
      %s216 = smul.u32 %s215, 2
      %s217 = smul.u32 %s216, 2
      %s218 = smul.u32 2, %s17
      %p219 = scmp.lt.s32.totalorder %s218, 7
      %s220 = scalar_select %p219, %s218, 7
      %s221 = smul.addr %s220, 8
      %s222 = scalar_lea.vmem %s3, %s221
      %s223 = smul.u32 2, %s17
      %s224 = ssub.s32 0, 0
      %p225 = scmp.lt.s32.totalorder %s224, 0
      %s226 = scalar_select %p225, 0, 255
      %v227 = vld [vmem:[%s211] sm:%s226]
      %s228 = smul.u32 2, %s17
      %v229 = vld [vmem:[%s222] sm:$0xff]
      %230 = xla_tuple %v229, %v9
      %231 = xla_tuple %230
      %v232 = vmax.f32 %v229, %v9
      %233 = xla_tuple %v232
      %235 = vst [vmem:[#allocation12] sm:$0xff] %v232
      %s236 = scalar_lea.vmem %s211, 8
      %s237 = ssub.s32 0, 0
      %p238 = scmp.lt.s32.totalorder %s237, 0
      %s239 = scalar_select %p238, 0, 255
      %v240 = vld [vmem:[%s236] sm:%s239]
      %s241 = scalar_lea.vmem %s222, 8
      %v242 = vld [vmem:[%s241] sm:$0xff]
      %243 = xla_tuple %v242, %v9
      %244 = xla_tuple %243
      %v245 = vmax.f32 %v242, %v9
      %246 = xla_tuple %v245
      %s247 = scalar_lea.vmem [#allocation12], 8
      %249 = vst [vmem:[%s247] sm:$0xff] %v245
      %s250 = scalar_lea.vmem %s211, 64
      %s251 = ssub.s32 0, 0
      %p252 = scmp.lt.s32.totalorder %s251, 0
      %s253 = scalar_select %p252, 0, 255
      %v254 = vld [vmem:[%s250] sm:%s253]
      %s255 = scalar_lea.vmem %s222, 64
      %v256 = vld [vmem:[%s255] sm:$0xff]
      %257 = xla_tuple %v256, %v9
      %258 = xla_tuple %257
      %v259 = vmax.f32 %v256, %v9
      %260 = xla_tuple %v259
      %s261 = scalar_lea.vmem [#allocation12], 16
      %263 = vst [vmem:[%s261] sm:$0xff] %v259
      %s264 = scalar_lea.vmem %s211, 72
      %s265 = ssub.s32 0, 0
      %p266 = scmp.lt.s32.totalorder %s265, 0
      %s267 = scalar_select %p266, 0, 255
      %v268 = vld [vmem:[%s264] sm:%s267]
      %s269 = scalar_lea.vmem %s222, 72
      %v270 = vld [vmem:[%s269] sm:$0xff]
      %271 = xla_tuple %v270, %v9
      %272 = xla_tuple %271
      %v273 = vmax.f32 %v270, %v9
      %274 = xla_tuple %v273
      %s275 = scalar_lea.vmem [#allocation12], 24
      %277 = vst [vmem:[%s275] sm:$0xff] %v273
      %278 = xla_tuple %v10, %v227
      %279 = xla_tuple %278
      %v280 = vmax.f32 %v10, %v227
      %281 = xla_tuple %v280
      %s282 = scalar_lea.vmem [#allocation12], 32
      %284 = vst [vmem:[%s282] sm:$0xff] %v280
      %s285 = scalar_lea.vmem %s211, 8
      %286 = xla_tuple %v10, %v240
      %287 = xla_tuple %286
      %v288 = vmax.f32 %v10, %v240
      %289 = xla_tuple %v288
      %s290 = scalar_lea.vmem [#allocation12], 40
      %292 = vst [vmem:[%s290] sm:$0xff] %v288
      %s293 = scalar_lea.vmem %s211, 64
      %294 = xla_tuple %v10, %v254
      %295 = xla_tuple %294
      %v296 = vmax.f32 %v10, %v254
      %297 = xla_tuple %v296
      %s298 = scalar_lea.vmem [#allocation12], 48
      %300 = vst [vmem:[%s298] sm:$0xff] %v296
      %s301 = scalar_lea.vmem %s211, 72
      %302 = xla_tuple %v10, %v268
      %303 = xla_tuple %302
      %v304 = vmax.f32 %v10, %v268
      %305 = xla_tuple %v304
      %s306 = scalar_lea.vmem [#allocation12], 56
      %308 = vst [vmem:[%s306] sm:$0xff] %v304
      %p309 = scmp.eq.s32.totalorder %s17, 0
      // Predicated region
      $region33: #{complex_layer_norm.5} parent=31 // pred_check
        %p310 = pneg %p309
      $region34: #{complex_layer_norm.5} parent=31 // pred_check_branch
        %312 = sbr.rel (%p310) target = $region36
      $region35: #{complex_layer_norm.5} parent=31 // pred_region
        %313 = vst [vmem:[%s4] sm:$0x1] 0.0
        %314 = vst [vmem:[%s4 + $0x1] sm:$0x1] 0.0
        %315 = vst [vmem:[%s4 + $0x2] sm:$0x1] 0.0
        %316 = vst [vmem:[%s4 + $0x3] sm:$0x1] 0.0
      $region36: #{complex_layer_norm.5} parent=31 // pred_fallthru
        _
      %v317 = vld [vmem:[#allocation12] sm:$0xff]
      %v318 = vld [vmem:[#allocation12 + $0x8] sm:$0xff]
      %v319 = vld [vmem:[#allocation12 + $0x10] sm:$0xff]
      %v320 = vld [vmem:[#allocation12 + $0x18] sm:$0xff]
      %s321 = scalar_lea.vmem [#allocation12], 32
      %v322 = vld [vmem:[%s321] sm:$0xff]
      %v323 = vld [vmem:[%s321 + $0x8] sm:$0xff]
      %v324 = vld [vmem:[%s321 + $0x10] sm:$0xff]
      %v325 = vld [vmem:[%s321 + $0x18] sm:$0xff]
      %v326 = vadd.f32 %v317, %v319
      %v327 = vadd.f32 %v318, %v320
      %v328 = vrcp.pop 2.0
      %v329 = vmul.f32 %v326, %v328
      %v330 = vmul.f32 %v327, %v328
      %v331 = vsub.f32 %v317, %v329
      %v332 = vsub.f32 %v318, %v330
      %v333 = vsub.f32 %v319, %v329
      %v334 = vsub.f32 %v320, %v330
      %v335 = vadd.f32 %v322, %v324
      %v336 = vadd.f32 %v323, %v325
      %v337 = vmul.f32 %v335, %v328
      %v338 = vmul.f32 %v336, %v328
      %v339 = vsub.f32 %v322, %v337
      %v340 = vsub.f32 %v323, %v338
      %v341 = vsub.f32 %v324, %v337
      %v342 = vsub.f32 %v325, %v338
      %v343 = vld [vmem:[%s4] sm:$0x1]
      %v344 = vmul.f32 %v331, %v331
      %v345 = vmul.f32 %v332, %v332
      %v346 = vmul.f32 %v333, %v333
      %v347 = vmul.f32 %v334, %v334
      %v348 = vadd.f32 %v344, %v346
      %v349 = vadd.f32 %v345, %v347
      %v350 = vadd.f32 %v348, %v349
      %v351 = vrot.slane %v350, 4
      %v352 = vadd.f32 %v350, %v351
      %v353 = vrot.slane %v352, 2
      %v354 = vadd.f32 %v352, %v353
      %v355 = vrot.slane %v354, 1
      %v356 = vadd.f32 %v354, %v355
      %v357 = vadd.f32 %v343, %v356
      %358 = vst [vmem:[%s4] sm:$0x1] %v357
      %s359 = scalar_lea.vmem %s4, 1
      %v360 = vld [vmem:[%s359] sm:$0x1]
      %v361 = vmul.f32 %v331, %v339
      %v362 = vmul.f32 %v332, %v340
      %v363 = vmul.f32 %v333, %v341
      %v364 = vmul.f32 %v334, %v342
      %v365 = vadd.f32 %v361, %v363
      %v366 = vadd.f32 %v362, %v364
      %v367 = vadd.f32 %v365, %v366
      %v368 = vrot.slane %v367, 4
      %v369 = vadd.f32 %v367, %v368
      %v370 = vrot.slane %v369, 2
      %v371 = vadd.f32 %v369, %v370
      %v372 = vrot.slane %v371, 1
      %v373 = vadd.f32 %v371, %v372
      %v374 = vadd.f32 %v360, %v373
      %375 = vst [vmem:[%s359] sm:$0x1] %v374
      %s376 = scalar_lea.vmem %s4, 2
      %v377 = vld [vmem:[%s376] sm:$0x1]
      %v378 = vmul.f32 %v339, %v339
      %v379 = vmul.f32 %v340, %v340
      %v380 = vmul.f32 %v341, %v341
      %v381 = vmul.f32 %v342, %v342
      %v382 = vadd.f32 %v378, %v380
      %v383 = vadd.f32 %v379, %v381
      %v384 = vadd.f32 %v382, %v383
      %v385 = vrot.slane %v384, 4
      %v386 = vadd.f32 %v384, %v385
      %v387 = vrot.slane %v386, 2
      %v388 = vadd.f32 %v386, %v387
      %v389 = vrot.slane %v388, 1
      %v390 = vadd.f32 %v388, %v389
      %v391 = vadd.f32 %v377, %v390
      %392 = vst [vmem:[%s376] sm:$0x1] %v391
      %p393 = scmp.eq.s32.totalorder %s17, 3
      // Predicated region
      $region37: #{complex_layer_norm.5} parent=31 // pred_check
        %p394 = pneg %p393
      $region38: #{complex_layer_norm.5} parent=31 // pred_check_branch
        %396 = sbr.rel (%p394) target = $region40
      $region39: #{complex_layer_norm.5} parent=31 // pred_region
        %v397 = vld [vmem:[%s4] sm:$0x1]
        %v398 = vmul.f32 %v397, 0.007874016
        %v399 = vadd.f32 %v398, 0.0001
        %v400 = vld [vmem:[%s359] sm:$0x1]
        %v401 = vmul.f32 %v400, 0.007874016
        %v402 = vld [vmem:[%s376] sm:$0x1]
        %v403 = vmul.f32 %v402, 0.007874016
        %v404 = vadd.f32 %v403, 0.0001
        %v405 = vmul.f32 %v399, %v404
        %v406 = vmul.f32 %v401, %v401
        %v407 = vsub.f32 %v405, %v406
        %v408 = vrsqrt.pop %v407
        %v409 = vmul.f32 %v407, %v408
        %vm410 = vcmp.eq.f32.partialorder %v407, inf
        %v411 = vsel %vm410, %v407, %v409
        %vm412 = vcmp.eq.f32.partialorder %v407, 0.0
        %v413 = vand.u32 %v407, 2147483648
        %v414 = vsel %vm412, %v413, %v411
        %v415 = vadd.f32 %v399, %v404
        %v416 = vmul.f32 %v414, 2.0
        %v417 = vadd.f32 %v415, %v416
        %v418 = vrsqrt.pop %v417
        %v419 = vmul.f32 %v417, %v418
        %vm420 = vcmp.eq.f32.partialorder %v417, inf
        %v421 = vsel %vm420, %v417, %v419
        %vm422 = vcmp.eq.f32.partialorder %v417, 0.0
        %v423 = vand.u32 %v417, 2147483648
        %v424 = vsel %vm422, %v423, %v421
        %v425 = vmul.f32 %v414, %v424
        %v426 = vrcp.pop %v425
        %v427 = vmul.f32 1.0, %v426
        %v428 = vadd.f32 %v404, %v414
        %v429 = vmul.f32 %v428, %v427
        %v430 = vsub.f32 0.0, %v401
        %v431 = vmul.f32 %v430, %v427
        %v432 = vadd.f32 %v399, %v414
        %v433 = vmul.f32 %v432, %v427
        %v434 = vld [vmem:[%s0] sm:$0x1]
        %s435 = scalar_lea.vmem %s0, 1
        %v436 = vld [vmem:[%s435] sm:$0x1]
        %v437 = vmul.f32 %v434, %v429
        %v438 = vmul.f32 %v436, %v431
        %v439 = vsub.f32 %v437, %v438
        %440 = vst [vmem:[%s4] sm:$0x1] %v439
        %v441 = vmul.f32 %v434, %v431
        %v442 = vmul.f32 %v436, %v433
        %v443 = vsub.f32 %v441, %v442
        %444 = vst [vmem:[%s359] sm:$0x1] %v443
        %v445 = vmul.f32 %v436, %v429
        %v446 = vadd.f32 %v445, %v441
        %447 = vst [vmem:[%s376] sm:$0x1] %v446
        %v448 = vmul.f32 %v434, %v433
        %v449 = vadd.f32 %v438, %v448
        %s450 = scalar_lea.vmem %s4, 3
        %451 = vst [vmem:[%s450] sm:$0x1] %v449
      $region40: #{complex_layer_norm.5} parent=31 // pred_fallthru
        _
      // Predicated region
      $region41: #{complex_layer_norm.5} parent=31 // pred_check
        %p452 = pneg %p107
      $region42: #{complex_layer_norm.5} parent=31 // pred_check_branch
        %454 = sbr.rel (%p452) target = $region44
      $region43: #{complex_layer_norm.5} parent=31 // pred_region
        _
      $region44: #{complex_layer_norm.5} parent=31 // pred_fallthru
        _
      // Predicated region
      $region45: #{complex_layer_norm.5} parent=31 // pred_check
        %p455 = pneg %p107
      $region46: #{complex_layer_norm.5} parent=31 // pred_check_branch
        %457 = sbr.rel (%p455) target = $region48
      $region47: #{complex_layer_norm.5} parent=31 // pred_region
        _
      $region48: #{complex_layer_norm.5} parent=31 // pred_fallthru
        _
    $region32: #{complex_layer_norm.5} parent=5 // pred_fallthru
      _
    %p458 = scmp.le.s32.totalorder 2, %s12
    // Predicated region
    $region49: #{complex_layer_norm.5} parent=5 // pred_check
      %p459 = pneg %p458
    $region50: #{complex_layer_norm.5} parent=5 // pred_check_branch
      %461 = sbr.rel (%p459) target = $region52
    $region51: #{complex_layer_norm.5} parent=5 // pred_region
      %s462 = ssub.s32 %s12, 2
    $region52: #{complex_layer_norm.5} parent=5 // pred_fallthru
      _
  $region6: #{complex_layer_norm.5} parent=0 // loop_footer
    %s16 = sadd.s32 1, %s12
  $region7: #{complex_layer_norm.5} parent=0 // loop_footer_branch
    %11 = sbr.rel target = $region3
  $region8: #{complex_layer_norm.5} parent=0 // loop_exit
    _

</llo_original>
